<compile_context>
chip_gen: v5e
topology: v5e:2x2
jax: 0.10.0
libtpu: 0.0.40
codegen_flags: <defaults>
</compile_context>

<pallas_src>
import functools

import jax
import jax.numpy as jnp
from jax.experimental import pallas as pl
from jax.experimental.pallas import tpu as pltpu

D_EMB = 300                      # embedding dim (conv kernel width)
N_FILTERS = 100                  # out_channels per conv branch
KERNEL_SIZES = (3, 4, 5)
NUM_SHIFTS = sum(KERNEL_SIZES)   # 12 kernel rows total across branches
C_PAD = 128                      # channels padded to a full lane tile
FC1_OUT = 100
FC2_OUT = 2


# ----------------------------------------------------------------------------
# Fused Pallas kernel: conv(3 branches) + relu + max-pool + fc1 + fc2
# ----------------------------------------------------------------------------
def textcnn_kernel(x_ref, wc_ref, cb_ref, w1_ref, b1_ref, w2_ref, b2_ref,
                   o_ref, y_scratch, *, batch_tile, seq_len, seq_pad):
    """Whole TextCNN forward for one batch tile.

    x_ref:  (batch_tile * seq_pad, 300)   flattened (batch, position) rows
    wc_ref: (300, NUM_SHIFTS * 128)       all conv kernel-rows, channel-padded
    cb_ref: (1, 3 * 128)                  conv biases (padded layout)
    w1_ref: (3 * 128, 128), b1_ref: (1, 128)   fc1 in padded layout
    w2_ref: (128, 2),       b2_ref: (1, 2)     fc2
    o_ref:  (batch_tile, 2)
    y_scratch: VMEM (batch_tile, seq_pad, 128) staging for shifted windows
    """
    x = x_ref[...]                                        # (B*Lp, 300) f32
    pooled = []
    j = 0
    for kh in KERNEL_SIZES:
        t_out = seq_len - kh + 1
        acc = None
        for i in range(kh):
            # One kernel-row of this branch: (300, 128) slab, lane-aligned.
            w_i = wc_ref[:, pl.ds(j * C_PAD, C_PAD)]
            y = jnp.dot(x, w_i, preferred_element_type=jnp.float32)
            # Stage as (B, Lp, 128) so the shifted window is a plain ref load.
            y_scratch[...] = y.reshape(batch_tile, seq_pad, C_PAD)
            win = y_scratch[:, pl.ds(i, t_out), :]        # (B, t_out, 128)
            acc = win if acc is None else acc + win
            j += 1
        pooled.append(jnp.max(acc, axis=1))               # (B, 128)
    feat = jnp.concatenate(pooled, axis=-1)               # (B, 384) lane-dense
    feat = jnp.maximum(feat + cb_ref[...], 0.0)           # post-pool bias+ReLU
    h = jnp.dot(feat, w1_ref[...], preferred_element_type=jnp.float32)
    h = h + b1_ref[...]
    out = jnp.dot(h, w2_ref[...], preferred_element_type=jnp.float32)
    out = out + b2_ref[...]
    o_ref[...] = out.astype(o_ref.dtype)


# ----------------------------------------------------------------------------
# Wrapper: weight packing + pallas_call
# ----------------------------------------------------------------------------
def _pack_params(params):
    """Lane-pad and fuse all weights into the layout the kernel expects."""
    conv_blocks, bias_blocks = [], []
    for kh in KERNEL_SIZES:
        w = params[f"conv{kh}_w"][:, 0, :, :]              # (100, kh, 300)
        for i in range(kh):
            wi = w[:, i, :].T                              # (300, 100)
            conv_blocks.append(jnp.pad(wi, ((0, 0), (0, C_PAD - N_FILTERS))))
        bias_blocks.append(
            jnp.pad(params[f"conv{kh}_b"].reshape(1, N_FILTERS),
                    ((0, 0), (0, C_PAD - N_FILTERS))))
    wc = jnp.concatenate(conv_blocks, axis=1)              # (300, 12*128)
    cb = jnp.concatenate(bias_blocks, axis=1)              # (1, 384)

    # fc1: rows follow the padded feature layout (branch b -> cols b*128+c).
    w1t = params["fc1_w"].T                                # (300, 100)
    w1_blocks = []
    for b in range(len(KERNEL_SIZES)):
        blk = w1t[b * N_FILTERS:(b + 1) * N_FILTERS, :]    # (100, 100)
        w1_blocks.append(jnp.pad(blk, ((0, C_PAD - N_FILTERS),
                                       (0, C_PAD - FC1_OUT))))
    w1 = jnp.concatenate(w1_blocks, axis=0)                # (384, 128)
    b1 = jnp.pad(params["fc1_b"].reshape(1, FC1_OUT),
                 ((0, 0), (0, C_PAD - FC1_OUT)))           # (1, 128)
    w2 = jnp.pad(params["fc2_w"].T, ((0, C_PAD - FC1_OUT), (0, 0)))  # (128, 2)
    b2 = params["fc2_b"].reshape(1, FC2_OUT)               # (1, 2)
    return wc, cb, w1, b1, w2, b2


def net_forward(x_nchw, params, batch_tile=None):
    """x_nchw: (N, 1, L, 300) float32 -> (N, 2) float32. One pallas_call."""
    x_seq = x_nchw[:, 0, :, :].astype(jnp.float32)         # (N, L, D)
    n, seq_len, d = x_seq.shape

    l_pad = -(-seq_len // 8) * 8                           # sublane-align L
    if batch_tile is None:
        # whole batch in one step when tiny; 8 rows/step (multiple grid
        # steps -> megacore-parallel axis) for larger batches.
        batch_tile = n if n <= 8 else 8
    n_pad = -(-n // batch_tile) * batch_tile
    if n_pad != n or l_pad != seq_len:
        x_seq = jnp.pad(x_seq, ((0, n_pad - n), (0, l_pad - seq_len), (0, 0)))
    x2d = x_seq.reshape(n_pad * l_pad, d)                  # (N_pad*Lp, 300)

    wc, cb, w1, b1, w2, b2 = _pack_params(params)

    rows = batch_tile * l_pad
    kernel = functools.partial(textcnn_kernel, batch_tile=batch_tile,
                               seq_len=seq_len, seq_pad=l_pad)
    out = pl.pallas_call(
        kernel,
        out_shape=jax.ShapeDtypeStruct((n_pad, FC2_OUT), jnp.float32),
        grid=(n_pad // batch_tile,),
        in_specs=[
            pl.BlockSpec((rows, D_EMB), lambda i: (i, 0)),
            pl.BlockSpec((D_EMB, NUM_SHIFTS * C_PAD), lambda i: (0, 0)),
            pl.BlockSpec((1, len(KERNEL_SIZES) * C_PAD), lambda i: (0, 0)),
            pl.BlockSpec((len(KERNEL_SIZES) * C_PAD, C_PAD), lambda i: (0, 0)),
            pl.BlockSpec((1, C_PAD), lambda i: (0, 0)),
            pl.BlockSpec((C_PAD, FC2_OUT), lambda i: (0, 0)),
            pl.BlockSpec((1, FC2_OUT), lambda i: (0, 0)),
        ],
        out_specs=pl.BlockSpec((batch_tile, FC2_OUT), lambda i: (i, 0)),
        scratch_shapes=[pltpu.VMEM((batch_tile, l_pad, C_PAD), jnp.float32)],
        compiler_params=pltpu.CompilerParams(
            dimension_semantics=("parallel",)),
    )(x2d, wc, cb, w1, b1, w2, b2)
    return out[:n]


# ----------------------------------------------------------------------------
# Deterministic parameter init (PyTorch-like uniform fan-in bounds)
# ----------------------------------------------------------------------------
def init_params(key):
    params = {}
    keys = jax.random.split(key, 10)
    ki = 0

    def uni(k, shape, fan_in):
        bound = 1.0 / jnp.sqrt(jnp.float32(fan_in))
        return jax.random.uniform(k, shape, jnp.float32, -bound, bound)

    for kh in KERNEL_SIZES:
        fan_in = 1 * kh * D_EMB
        params[f"conv{kh}_w"] = uni(keys[ki], (N_FILTERS, 1, kh, D_EMB), fan_in); ki += 1
        params[f"conv{kh}_b"] = uni(keys[ki], (N_FILTERS,), fan_in); ki += 1
    params["fc1_w"] = uni(keys[ki], (FC1_OUT, 3 * N_FILTERS), 3 * N_FILTERS); ki += 1
    params["fc1_b"] = uni(keys[ki], (FC1_OUT,), 3 * N_FILTERS); ki += 1
    params["fc2_w"] = uni(keys[ki], (FC2_OUT, FC1_OUT), FC1_OUT); ki += 1
    params["fc2_b"] = uni(keys[ki], (FC2_OUT,), FC1_OUT); ki += 1
    return params


# ----------------------------------------------------------------------------
# Pure-JAX reference for a sanity check
# ----------------------------------------------------------------------------
def net_forward_ref(x_nchw, params):
    x_seq = x_nchw[:, 0, :, :]
    pooled = []
    for kh in KERNEL_SIZES:
        w = params[f"conv{kh}_w"].reshape(N_FILTERS, kh * D_EMB)
        b = params[f"conv{kh}_b"]
        t_out = x_seq.shape[1] - kh + 1
        x_unf = jnp.concatenate(
            [x_seq[:, i:i + t_out, :] for i in range(kh)], axis=-1)
        y = jnp.einsum("ntk,ck->ntc", x_unf, w) + b
        pooled.append(jnp.max(jax.nn.relu(y), axis=1))
    feat = jnp.concatenate(pooled, axis=1)
    h = feat @ params["fc1_w"].T + params["fc1_b"]
    return h @ params["fc2_w"].T + params["fc2_b"]


if __name__ == "__main__":
    key = jax.random.PRNGKey(0)
    pkey, xkey = jax.random.split(key)
    params = init_params(pkey)

    # Small input consistent with the module: (N=2, C=1, L=16, D=300)
    x = jax.random.normal(xkey, (2, 1, 16, D_EMB), dtype=jnp.float32)

    out = jax.jit(net_forward)(x, params)
    out = jax.block_until_ready(out)

    ref = net_forward_ref(x, params)
    assert out.shape == (2, 2), out.shape
    assert jnp.allclose(out, ref, atol=1e-3, rtol=1e-3), (out, ref)

    print("KERNEL_OK")
</pallas_src>

<mosaic_0001>
module attributes {stable_mosaic.version = 11 : i64} {
  func.func @textcnn_kernel(%arg0: i32, %arg1: memref<32x300xf32, #tpu.memory_space<vmem>>, %arg2: memref<300x1536xf32, #tpu.memory_space<vmem>>, %arg3: memref<1x384xf32, #tpu.memory_space<vmem>>, %arg4: memref<384x128xf32, #tpu.memory_space<vmem>>, %arg5: memref<1x128xf32, #tpu.memory_space<vmem>>, %arg6: memref<128x2xf32, #tpu.memory_space<vmem>>, %arg7: memref<1x2xf32, #tpu.memory_space<vmem>>, %arg8: memref<2x2xf32, #tpu.memory_space<vmem>>, %arg9: memref<2x16x128xf32, #tpu.memory_space<vmem>>) attributes {dimension_semantics = [#tpu.dimension_semantics<parallel>], iteration_bounds = array<i64: 1>, scalar_prefetch = 0 : i64, scratch_operands = 1 : i64, tpu.core_type = #tpu.core_type<tc>, window_params = [{transform_indices = @transform_0, window_bounds = array<i64: 32, 300>}, {pipeline_mode = #tpu.pipeline_mode<synchronous>, transform_indices = @transform_1, window_bounds = array<i64: 300, 1536>}, {pipeline_mode = #tpu.pipeline_mode<synchronous>, transform_indices = @transform_2, window_bounds = array<i64: 1, 384>}, {pipeline_mode = #tpu.pipeline_mode<synchronous>, transform_indices = @transform_3, window_bounds = array<i64: 384, 128>}, {pipeline_mode = #tpu.pipeline_mode<synchronous>, transform_indices = @transform_4, window_bounds = array<i64: 1, 128>}, {pipeline_mode = #tpu.pipeline_mode<synchronous>, transform_indices = @transform_5, window_bounds = array<i64: 128, 2>}, {pipeline_mode = #tpu.pipeline_mode<synchronous>, transform_indices = @transform_6, window_bounds = array<i64: 1, 2>}, {transform_indices = @transform_7, window_bounds = array<i64: 2, 2>}]} {
    %c0 = arith.constant 0 : index
    %c0_0 = arith.constant 0 : index
    %0 = vector.load %arg1[%c0, %c0_0] : memref<32x300xf32, #tpu.memory_space<vmem>>, vector<32x300xf32>
    %c0_1 = arith.constant 0 : index
    %c0_2 = arith.constant 0 : index
    %1 = vector.load %arg2[%c0_1, %c0_2] : memref<300x1536xf32, #tpu.memory_space<vmem>>, vector<300x128xf32>
    %cst = arith.constant dense<0.000000e+00> : vector<32x128xf32>
    %2 = tpu.matmul %0, %1, %cst {dimension_numbers = #tpu.dot_dimension_numbers<[1], [0], [0], [1], [0, 0, 1, 1], [], []>} : vector<32x300xf32>, vector<300x128xf32>, vector<32x128xf32> -> vector<32x128xf32>
    %3 = vector.shape_cast %2 : vector<32x128xf32> to vector<2x16x128xf32>
    %c0_3 = arith.constant 0 : index
    %c0_4 = arith.constant 0 : index
    %c0_5 = arith.constant 0 : index
    %4 = vector.load %arg9[%c0_3, %c0_4, %c0_5] : memref<2x16x128xf32, #tpu.memory_space<vmem>>, vector<2x16x128xf32>
    tpu.vector_store %arg9[%c0_3, %c0_4, %c0_5], %3 {strides = array<i32>} : memref<2x16x128xf32, #tpu.memory_space<vmem>>, vector<2x16x128xf32>,
    %c0_6 = arith.constant 0 : index
    %c0_7 = arith.constant 0 : index
    %c0_8 = arith.constant 0 : index
    %5 = vector.load %arg9[%c0_6, %c0_7, %c0_8] : memref<2x16x128xf32, #tpu.memory_space<vmem>>, vector<2x14x128xf32>
    %c0_9 = arith.constant 0 : index
    %c128 = arith.constant 128 : index
    %6 = vector.load %arg2[%c0_9, %c128] : memref<300x1536xf32, #tpu.memory_space<vmem>>, vector<300x128xf32>
    %cst_10 = arith.constant dense<0.000000e+00> : vector<32x128xf32>
    %7 = tpu.matmul %0, %6, %cst_10 {dimension_numbers = #tpu.dot_dimension_numbers<[1], [0], [0], [1], [0, 0, 1, 1], [], []>} : vector<32x300xf32>, vector<300x128xf32>, vector<32x128xf32> -> vector<32x128xf32>
    %8 = vector.shape_cast %7 : vector<32x128xf32> to vector<2x16x128xf32>
    %c0_11 = arith.constant 0 : index
    %c0_12 = arith.constant 0 : index
    %c0_13 = arith.constant 0 : index
    %9 = vector.load %arg9[%c0_11, %c0_12, %c0_13] : memref<2x16x128xf32, #tpu.memory_space<vmem>>, vector<2x16x128xf32>
    tpu.vector_store %arg9[%c0_11, %c0_12, %c0_13], %8 {strides = array<i32>} : memref<2x16x128xf32, #tpu.memory_space<vmem>>, vector<2x16x128xf32>,
    %c0_14 = arith.constant 0 : index
    %c1 = arith.constant 1 : index
    %c0_15 = arith.constant 0 : index
    %10 = vector.load %arg9[%c0_14, %c1, %c0_15] : memref<2x16x128xf32, #tpu.memory_space<vmem>>, vector<2x14x128xf32>
    %11 = arith.addf %5, %10 : vector<2x14x128xf32>
    %c0_16 = arith.constant 0 : index
    %c256 = arith.constant 256 : index
    %12 = vector.load %arg2[%c0_16, %c256] : memref<300x1536xf32, #tpu.memory_space<vmem>>, vector<300x128xf32>
    %cst_17 = arith.constant dense<0.000000e+00> : vector<32x128xf32>
    %13 = tpu.matmul %0, %12, %cst_17 {dimension_numbers = #tpu.dot_dimension_numbers<[1], [0], [0], [1], [0, 0, 1, 1], [], []>} : vector<32x300xf32>, vector<300x128xf32>, vector<32x128xf32> -> vector<32x128xf32>
    %14 = vector.shape_cast %13 : vector<32x128xf32> to vector<2x16x128xf32>
    %c0_18 = arith.constant 0 : index
    %c0_19 = arith.constant 0 : index
    %c0_20 = arith.constant 0 : index
    %15 = vector.load %arg9[%c0_18, %c0_19, %c0_20] : memref<2x16x128xf32, #tpu.memory_space<vmem>>, vector<2x16x128xf32>
    tpu.vector_store %arg9[%c0_18, %c0_19, %c0_20], %14 {strides = array<i32>} : memref<2x16x128xf32, #tpu.memory_space<vmem>>, vector<2x16x128xf32>,
    %c0_21 = arith.constant 0 : index
    %c2 = arith.constant 2 : index
    %c0_22 = arith.constant 0 : index
    %16 = vector.load %arg9[%c0_21, %c2, %c0_22] : memref<2x16x128xf32, #tpu.memory_space<vmem>>, vector<2x14x128xf32>
    %17 = arith.addf %11, %16 : vector<2x14x128xf32>
    %cst_23 = arith.constant dense<0xFF800000> : vector<2x128xf32>
    %18 = vector.multi_reduction <maximumf>, %17, %cst_23 [1] : vector<2x14x128xf32> to vector<2x128xf32>
    %c0_24 = arith.constant 0 : index
    %c384 = arith.constant 384 : index
    %19 = vector.load %arg2[%c0_24, %c384] : memref<300x1536xf32, #tpu.memory_space<vmem>>, vector<300x128xf32>
    %cst_25 = arith.constant dense<0.000000e+00> : vector<32x128xf32>
    %20 = tpu.matmul %0, %19, %cst_25 {dimension_numbers = #tpu.dot_dimension_numbers<[1], [0], [0], [1], [0, 0, 1, 1], [], []>} : vector<32x300xf32>, vector<300x128xf32>, vector<32x128xf32> -> vector<32x128xf32>
    %21 = vector.shape_cast %20 : vector<32x128xf32> to vector<2x16x128xf32>
    %c0_26 = arith.constant 0 : index
    %c0_27 = arith.constant 0 : index
    %c0_28 = arith.constant 0 : index
    %22 = vector.load %arg9[%c0_26, %c0_27, %c0_28] : memref<2x16x128xf32, #tpu.memory_space<vmem>>, vector<2x16x128xf32>
    tpu.vector_store %arg9[%c0_26, %c0_27, %c0_28], %21 {strides = array<i32>} : memref<2x16x128xf32, #tpu.memory_space<vmem>>, vector<2x16x128xf32>,
    %c0_29 = arith.constant 0 : index
    %c0_30 = arith.constant 0 : index
    %c0_31 = arith.constant 0 : index
    %23 = vector.load %arg9[%c0_29, %c0_30, %c0_31] : memref<2x16x128xf32, #tpu.memory_space<vmem>>, vector<2x13x128xf32>
    %c0_32 = arith.constant 0 : index
    %c512 = arith.constant 512 : index
    %24 = vector.load %arg2[%c0_32, %c512] : memref<300x1536xf32, #tpu.memory_space<vmem>>, vector<300x128xf32>
    %cst_33 = arith.constant dense<0.000000e+00> : vector<32x128xf32>
    %25 = tpu.matmul %0, %24, %cst_33 {dimension_numbers = #tpu.dot_dimension_numbers<[1], [0], [0], [1], [0, 0, 1, 1], [], []>} : vector<32x300xf32>, vector<300x128xf32>, vector<32x128xf32> -> vector<32x128xf32>
    %26 = vector.shape_cast %25 : vector<32x128xf32> to vector<2x16x128xf32>
    %c0_34 = arith.constant 0 : index
    %c0_35 = arith.constant 0 : index
    %c0_36 = arith.constant 0 : index
    %27 = vector.load %arg9[%c0_34, %c0_35, %c0_36] : memref<2x16x128xf32, #tpu.memory_space<vmem>>, vector<2x16x128xf32>
    tpu.vector_store %arg9[%c0_34, %c0_35, %c0_36], %26 {strides = array<i32>} : memref<2x16x128xf32, #tpu.memory_space<vmem>>, vector<2x16x128xf32>,
    %c0_37 = arith.constant 0 : index
    %c1_38 = arith.constant 1 : index
    %c0_39 = arith.constant 0 : index
    %28 = vector.load %arg9[%c0_37, %c1_38, %c0_39] : memref<2x16x128xf32, #tpu.memory_space<vmem>>, vector<2x13x128xf32>
    %29 = arith.addf %23, %28 : vector<2x13x128xf32>
    %c0_40 = arith.constant 0 : index
    %c640 = arith.constant 640 : index
    %30 = vector.load %arg2[%c0_40, %c640] : memref<300x1536xf32, #tpu.memory_space<vmem>>, vector<300x128xf32>
    %cst_41 = arith.constant dense<0.000000e+00> : vector<32x128xf32>
    %31 = tpu.matmul %0, %30, %cst_41 {dimension_numbers = #tpu.dot_dimension_numbers<[1], [0], [0], [1], [0, 0, 1, 1], [], []>} : vector<32x300xf32>, vector<300x128xf32>, vector<32x128xf32> -> vector<32x128xf32>
    %32 = vector.shape_cast %31 : vector<32x128xf32> to vector<2x16x128xf32>
    %c0_42 = arith.constant 0 : index
    %c0_43 = arith.constant 0 : index
    %c0_44 = arith.constant 0 : index
    %33 = vector.load %arg9[%c0_42, %c0_43, %c0_44] : memref<2x16x128xf32, #tpu.memory_space<vmem>>, vector<2x16x128xf32>
    tpu.vector_store %arg9[%c0_42, %c0_43, %c0_44], %32 {strides = array<i32>} : memref<2x16x128xf32, #tpu.memory_space<vmem>>, vector<2x16x128xf32>,
    %c0_45 = arith.constant 0 : index
    %c2_46 = arith.constant 2 : index
    %c0_47 = arith.constant 0 : index
    %34 = vector.load %arg9[%c0_45, %c2_46, %c0_47] : memref<2x16x128xf32, #tpu.memory_space<vmem>>, vector<2x13x128xf32>
    %35 = arith.addf %29, %34 : vector<2x13x128xf32>
    %c0_48 = arith.constant 0 : index
    %c768 = arith.constant 768 : index
    %36 = vector.load %arg2[%c0_48, %c768] : memref<300x1536xf32, #tpu.memory_space<vmem>>, vector<300x128xf32>
    %cst_49 = arith.constant dense<0.000000e+00> : vector<32x128xf32>
    %37 = tpu.matmul %0, %36, %cst_49 {dimension_numbers = #tpu.dot_dimension_numbers<[1], [0], [0], [1], [0, 0, 1, 1], [], []>} : vector<32x300xf32>, vector<300x128xf32>, vector<32x128xf32> -> vector<32x128xf32>
    %38 = vector.shape_cast %37 : vector<32x128xf32> to vector<2x16x128xf32>
    %c0_50 = arith.constant 0 : index
    %c0_51 = arith.constant 0 : index
    %c0_52 = arith.constant 0 : index
    %39 = vector.load %arg9[%c0_50, %c0_51, %c0_52] : memref<2x16x128xf32, #tpu.memory_space<vmem>>, vector<2x16x128xf32>
    tpu.vector_store %arg9[%c0_50, %c0_51, %c0_52], %38 {strides = array<i32>} : memref<2x16x128xf32, #tpu.memory_space<vmem>>, vector<2x16x128xf32>,
    %c0_53 = arith.constant 0 : index
    %c3 = arith.constant 3 : index
    %c0_54 = arith.constant 0 : index
    %40 = vector.load %arg9[%c0_53, %c3, %c0_54] : memref<2x16x128xf32, #tpu.memory_space<vmem>>, vector<2x13x128xf32>
    %41 = arith.addf %35, %40 : vector<2x13x128xf32>
    %cst_55 = arith.constant dense<0xFF800000> : vector<2x128xf32>
    %42 = vector.multi_reduction <maximumf>, %41, %cst_55 [1] : vector<2x13x128xf32> to vector<2x128xf32>
    %c0_56 = arith.constant 0 : index
    %c896 = arith.constant 896 : index
    %43 = vector.load %arg2[%c0_56, %c896] : memref<300x1536xf32, #tpu.memory_space<vmem>>, vector<300x128xf32>
    %cst_57 = arith.constant dense<0.000000e+00> : vector<32x128xf32>
    %44 = tpu.matmul %0, %43, %cst_57 {dimension_numbers = #tpu.dot_dimension_numbers<[1], [0], [0], [1], [0, 0, 1, 1], [], []>} : vector<32x300xf32>, vector<300x128xf32>, vector<32x128xf32> -> vector<32x128xf32>
    %45 = vector.shape_cast %44 : vector<32x128xf32> to vector<2x16x128xf32>
    %c0_58 = arith.constant 0 : index
    %c0_59 = arith.constant 0 : index
    %c0_60 = arith.constant 0 : index
    %46 = vector.load %arg9[%c0_58, %c0_59, %c0_60] : memref<2x16x128xf32, #tpu.memory_space<vmem>>, vector<2x16x128xf32>
    tpu.vector_store %arg9[%c0_58, %c0_59, %c0_60], %45 {strides = array<i32>} : memref<2x16x128xf32, #tpu.memory_space<vmem>>, vector<2x16x128xf32>,
    %c0_61 = arith.constant 0 : index
    %c0_62 = arith.constant 0 : index
    %c0_63 = arith.constant 0 : index
    %47 = vector.load %arg9[%c0_61, %c0_62, %c0_63] : memref<2x16x128xf32, #tpu.memory_space<vmem>>, vector<2x12x128xf32>
    %c0_64 = arith.constant 0 : index
    %c1024 = arith.constant 1024 : index
    %48 = vector.load %arg2[%c0_64, %c1024] : memref<300x1536xf32, #tpu.memory_space<vmem>>, vector<300x128xf32>
    %cst_65 = arith.constant dense<0.000000e+00> : vector<32x128xf32>
    %49 = tpu.matmul %0, %48, %cst_65 {dimension_numbers = #tpu.dot_dimension_numbers<[1], [0], [0], [1], [0, 0, 1, 1], [], []>} : vector<32x300xf32>, vector<300x128xf32>, vector<32x128xf32> -> vector<32x128xf32>
    %50 = vector.shape_cast %49 : vector<32x128xf32> to vector<2x16x128xf32>
    %c0_66 = arith.constant 0 : index
    %c0_67 = arith.constant 0 : index
    %c0_68 = arith.constant 0 : index
    %51 = vector.load %arg9[%c0_66, %c0_67, %c0_68] : memref<2x16x128xf32, #tpu.memory_space<vmem>>, vector<2x16x128xf32>
    tpu.vector_store %arg9[%c0_66, %c0_67, %c0_68], %50 {strides = array<i32>} : memref<2x16x128xf32, #tpu.memory_space<vmem>>, vector<2x16x128xf32>,
    %c0_69 = arith.constant 0 : index
    %c1_70 = arith.constant 1 : index
    %c0_71 = arith.constant 0 : index
    %52 = vector.load %arg9[%c0_69, %c1_70, %c0_71] : memref<2x16x128xf32, #tpu.memory_space<vmem>>, vector<2x12x128xf32>
    %53 = arith.addf %47, %52 : vector<2x12x128xf32>
    %c0_72 = arith.constant 0 : index
    %c1152 = arith.constant 1152 : index
    %54 = vector.load %arg2[%c0_72, %c1152] : memref<300x1536xf32, #tpu.memory_space<vmem>>, vector<300x128xf32>
    %cst_73 = arith.constant dense<0.000000e+00> : vector<32x128xf32>
    %55 = tpu.matmul %0, %54, %cst_73 {dimension_numbers = #tpu.dot_dimension_numbers<[1], [0], [0], [1], [0, 0, 1, 1], [], []>} : vector<32x300xf32>, vector<300x128xf32>, vector<32x128xf32> -> vector<32x128xf32>
    %56 = vector.shape_cast %55 : vector<32x128xf32> to vector<2x16x128xf32>
    %c0_74 = arith.constant 0 : index
    %c0_75 = arith.constant 0 : index
    %c0_76 = arith.constant 0 : index
    %57 = vector.load %arg9[%c0_74, %c0_75, %c0_76] : memref<2x16x128xf32, #tpu.memory_space<vmem>>, vector<2x16x128xf32>
    tpu.vector_store %arg9[%c0_74, %c0_75, %c0_76], %56 {strides = array<i32>} : memref<2x16x128xf32, #tpu.memory_space<vmem>>, vector<2x16x128xf32>,
    %c0_77 = arith.constant 0 : index
    %c2_78 = arith.constant 2 : index
    %c0_79 = arith.constant 0 : index
    %58 = vector.load %arg9[%c0_77, %c2_78, %c0_79] : memref<2x16x128xf32, #tpu.memory_space<vmem>>, vector<2x12x128xf32>
    %59 = arith.addf %53, %58 : vector<2x12x128xf32>
    %c0_80 = arith.constant 0 : index
    %c1280 = arith.constant 1280 : index
    %60 = vector.load %arg2[%c0_80, %c1280] : memref<300x1536xf32, #tpu.memory_space<vmem>>, vector<300x128xf32>
    %cst_81 = arith.constant dense<0.000000e+00> : vector<32x128xf32>
    %61 = tpu.matmul %0, %60, %cst_81 {dimension_numbers = #tpu.dot_dimension_numbers<[1], [0], [0], [1], [0, 0, 1, 1], [], []>} : vector<32x300xf32>, vector<300x128xf32>, vector<32x128xf32> -> vector<32x128xf32>
    %62 = vector.shape_cast %61 : vector<32x128xf32> to vector<2x16x128xf32>
    %c0_82 = arith.constant 0 : index
    %c0_83 = arith.constant 0 : index
    %c0_84 = arith.constant 0 : index
    %63 = vector.load %arg9[%c0_82, %c0_83, %c0_84] : memref<2x16x128xf32, #tpu.memory_space<vmem>>, vector<2x16x128xf32>
    tpu.vector_store %arg9[%c0_82, %c0_83, %c0_84], %62 {strides = array<i32>} : memref<2x16x128xf32, #tpu.memory_space<vmem>>, vector<2x16x128xf32>,
    %c0_85 = arith.constant 0 : index
    %c3_86 = arith.constant 3 : index
    %c0_87 = arith.constant 0 : index
    %64 = vector.load %arg9[%c0_85, %c3_86, %c0_87] : memref<2x16x128xf32, #tpu.memory_space<vmem>>, vector<2x12x128xf32>
    %65 = arith.addf %59, %64 : vector<2x12x128xf32>
    %c0_88 = arith.constant 0 : index
    %c1408 = arith.constant 1408 : index
    %66 = vector.load %arg2[%c0_88, %c1408] : memref<300x1536xf32, #tpu.memory_space<vmem>>, vector<300x128xf32>
    %cst_89 = arith.constant dense<0.000000e+00> : vector<32x128xf32>
    %67 = tpu.matmul %0, %66, %cst_89 {dimension_numbers = #tpu.dot_dimension_numbers<[1], [0], [0], [1], [0, 0, 1, 1], [], []>} : vector<32x300xf32>, vector<300x128xf32>, vector<32x128xf32> -> vector<32x128xf32>
    %68 = vector.shape_cast %67 : vector<32x128xf32> to vector<2x16x128xf32>
    %c0_90 = arith.constant 0 : index
    %c0_91 = arith.constant 0 : index
    %c0_92 = arith.constant 0 : index
    %69 = vector.load %arg9[%c0_90, %c0_91, %c0_92] : memref<2x16x128xf32, #tpu.memory_space<vmem>>, vector<2x16x128xf32>
    tpu.vector_store %arg9[%c0_90, %c0_91, %c0_92], %68 {strides = array<i32>} : memref<2x16x128xf32, #tpu.memory_space<vmem>>, vector<2x16x128xf32>,
    %c0_93 = arith.constant 0 : index
    %c4 = arith.constant 4 : index
    %c0_94 = arith.constant 0 : index
    %70 = vector.load %arg9[%c0_93, %c4, %c0_94] : memref<2x16x128xf32, #tpu.memory_space<vmem>>, vector<2x12x128xf32>
    %71 = arith.addf %65, %70 : vector<2x12x128xf32>
    %cst_95 = arith.constant dense<0xFF800000> : vector<2x128xf32>
    %72 = vector.multi_reduction <maximumf>, %71, %cst_95 [1] : vector<2x12x128xf32> to vector<2x128xf32>
    %73 = tpu.concatenate %18, %42, %72 in 1 : vector<2x128xf32>, vector<2x128xf32>, vector<2x128xf32> -> vector<2x384xf32>
    %c0_96 = arith.constant 0 : index
    %c0_97 = arith.constant 0 : index
    %74 = vector.load %arg3[%c0_96, %c0_97] : memref<1x384xf32, #tpu.memory_space<vmem>>, vector<1x384xf32>
    %75 = vector.broadcast %74 : vector<1x384xf32> to vector<2x384xf32>
    %76 = arith.addf %73, %75 : vector<2x384xf32>
    %cst_98 = arith.constant 0.000000e+00 : f32
    %77 = vector.broadcast %cst_98 : f32 to vector<2x384xf32>
    %78 = arith.maximumf %76, %77 : vector<2x384xf32>
    %c0_99 = arith.constant 0 : index
    %c0_100 = arith.constant 0 : index
    %79 = vector.load %arg4[%c0_99, %c0_100] : memref<384x128xf32, #tpu.memory_space<vmem>>, vector<384x128xf32>
    %cst_101 = arith.constant dense<0.000000e+00> : vector<2x128xf32>
    %80 = tpu.matmul %78, %79, %cst_101 {dimension_numbers = #tpu.dot_dimension_numbers<[1], [0], [0], [1], [0, 0, 1, 1], [], []>} : vector<2x384xf32>, vector<384x128xf32>, vector<2x128xf32> -> vector<2x128xf32>
    %c0_102 = arith.constant 0 : index
    %c0_103 = arith.constant 0 : index
    %81 = vector.load %arg5[%c0_102, %c0_103] : memref<1x128xf32, #tpu.memory_space<vmem>>, vector<1x128xf32>
    %82 = vector.broadcast %81 : vector<1x128xf32> to vector<2x128xf32>
    %83 = arith.addf %80, %82 : vector<2x128xf32>
    %c0_104 = arith.constant 0 : index
    %c0_105 = arith.constant 0 : index
    %84 = vector.load %arg6[%c0_104, %c0_105] : memref<128x2xf32, #tpu.memory_space<vmem>>, vector<128x2xf32>
    %cst_106 = arith.constant dense<0.000000e+00> : vector<2x2xf32>
    %85 = tpu.matmul %83, %84, %cst_106 {dimension_numbers = #tpu.dot_dimension_numbers<[1], [0], [0], [1], [0, 0, 1, 1], [], []>} : vector<2x128xf32>, vector<128x2xf32>, vector<2x2xf32> -> vector<2x2xf32>
    %c0_107 = arith.constant 0 : index
    %c0_108 = arith.constant 0 : index
    %86 = vector.load %arg7[%c0_107, %c0_108] : memref<1x2xf32, #tpu.memory_space<vmem>>, vector<1x2xf32>
    %87 = vector.broadcast %86 : vector<1x2xf32> to vector<2x2xf32>
    %88 = arith.addf %85, %87 : vector<2x2xf32>
    %c0_109 = arith.constant 0 : index
    %c0_110 = arith.constant 0 : index
    %89 = vector.load %arg8[%c0_109, %c0_110] : memref<2x2xf32, #tpu.memory_space<vmem>>, vector<2x2xf32>
    tpu.vector_store %arg8[%c0_109, %c0_110], %88 {strides = array<i32>} : memref<2x2xf32, #tpu.memory_space<vmem>>, vector<2x2xf32>,
    return
  }
  func.func @transform_0(%arg0: i32) -> (i32, i32) {
    %c0_i32 = arith.constant 0 : i32
    %c0_i32_0 = arith.constant 0 : i32
    return %arg0, %c0_i32 : i32, i32
  }
  func.func @transform_1(%arg0: i32) -> (i32, i32) {
    %c0_i32 = arith.constant 0 : i32
    %c0_i32_0 = arith.constant 0 : i32
    %c0_i32_1 = arith.constant 0 : i32
    return %c0_i32, %c0_i32_0 : i32, i32
  }
  func.func @transform_2(%arg0: i32) -> (i32, i32) {
    %c0_i32 = arith.constant 0 : i32
    %c0_i32_0 = arith.constant 0 : i32
    %c0_i32_1 = arith.constant 0 : i32
    return %c0_i32, %c0_i32_0 : i32, i32
  }
  func.func @transform_3(%arg0: i32) -> (i32, i32) {
    %c0_i32 = arith.constant 0 : i32
    %c0_i32_0 = arith.constant 0 : i32
    %c0_i32_1 = arith.constant 0 : i32
    return %c0_i32, %c0_i32_0 : i32, i32
  }
  func.func @transform_4(%arg0: i32) -> (i32, i32) {
    %c0_i32 = arith.constant 0 : i32
    %c0_i32_0 = arith.constant 0 : i32
    %c0_i32_1 = arith.constant 0 : i32
    return %c0_i32, %c0_i32_0 : i32, i32
  }
  func.func @transform_5(%arg0: i32) -> (i32, i32) {
    %c0_i32 = arith.constant 0 : i32
    %c0_i32_0 = arith.constant 0 : i32
    %c0_i32_1 = arith.constant 0 : i32
    return %c0_i32, %c0_i32_0 : i32, i32
  }
  func.func @transform_6(%arg0: i32) -> (i32, i32) {
    %c0_i32 = arith.constant 0 : i32
    %c0_i32_0 = arith.constant 0 : i32
    %c0_i32_1 = arith.constant 0 : i32
    return %c0_i32, %c0_i32_0 : i32, i32
  }
  func.func @transform_7(%arg0: i32) -> (i32, i32) {
    %c0_i32 = arith.constant 0 : i32
    %c0_i32_0 = arith.constant 0 : i32
    return %arg0, %c0_i32 : i32, i32
  }
}

</mosaic_0001>

<llo_original>
// kernel: net_forward.1
$region0: #{net_forward.1}
  #allocation0 [shape = 'u32[]', space=smem, size = 0x4, offset = 0x4, fixed_abs, tag = 'smem constant byte address 0x4 - core index']
  #allocation1 [shape = 'u32[72,128]{1,0:T(1,128)}', space=vmem, size = 0x9000, scoped, tag = 'internal scratch']
  #allocation2 [shape = 'f32[2,16,128]{2,1,0:T(8,128)}', space=vmem, size = 0x4000, scoped, tag = 'scratch operand']
  %s0 = inlined_call_operand.vmem [shape: f32[32,300], index: 0, kind: input, shape index: {}]
  %s1 = inlined_call_operand.vmem [shape: f32[300,1536], index: 1, kind: input, shape index: {}]
  %s2 = inlined_call_operand.vmem [shape: f32[1,384], index: 2, kind: input, shape index: {}]
  %s3 = inlined_call_operand.vmem [shape: f32[384,128], index: 3, kind: input, shape index: {}]
  %s4 = inlined_call_operand.vmem [shape: f32[1,128], index: 4, kind: input, shape index: {}]
  %s5 = inlined_call_operand.vmem [shape: f32[128,2], index: 5, kind: input, shape index: {}]
  %s6 = inlined_call_operand.vmem [shape: f32[1,2], index: 6, kind: input, shape index: {}]
  %s7 = inlined_call_operand.hbm [shape: f32[2,2], index: 7, kind: output, shape index: {}]
  %s8 = sld [smem:[#allocation0]]
  $region38: #{net_forward.1} parent=0
    _
  %s10 = ssub.s32 1, %s8
  %s11 = scalar_select 0, %s10, %s8
  $region1: #{net_forward.1} parent=0
    #allocation3 [shape = 'u8[1024]{0}', space=vmem, size = 0x400, scoped, tag = 'output window, operand 0, single buffered']
    #allocation4 [shape = 's32[1]{0}', space=sflag, size = 0x4, scoped, tag = 'scoped memory for net_forward.1']
    %12 = vsyncpa [#allocation4], 0
    // Predicated region
    $region2: #{net_forward.1} parent=1 // pred_check
      _
    $region3: #{net_forward.1} parent=1 // pred_check_branch
      %14 = sbr.rel (0) target = $region5
    $region4: #{net_forward.1} parent=1 // pred_region
      _
    $region5: #{net_forward.1} parent=1 // pred_fallthru
      _
    // Predicated region
    $region6: #{net_forward.1} parent=1 // pred_check
      _
    $region7: #{net_forward.1} parent=1 // pred_check_branch
      %16 = sbr.rel (0) target = $region9
    $region8: #{net_forward.1} parent=1 // pred_region
      _
    $region9: #{net_forward.1} parent=1 // pred_fallthru
      _
    // Predicated region
    $region10: #{net_forward.1} parent=1 // pred_check
      _
    $region11: #{net_forward.1} parent=1 // pred_check_branch
      %18 = sbr.rel (0) target = $region13
    $region12: #{net_forward.1} parent=1 // pred_region
      _
    $region13: #{net_forward.1} parent=1 // pred_fallthru
      _
    // Predicated region
    $region14: #{net_forward.1} parent=1 // pred_check
      _
    $region15: #{net_forward.1} parent=1 // pred_check_branch
      %20 = sbr.rel (0) target = $region17
    $region16: #{net_forward.1} parent=1 // pred_region
      _
    $region17: #{net_forward.1} parent=1 // pred_fallthru
      _
    // Predicated region
    $region18: #{net_forward.1} parent=1 // pred_check
      _
    $region19: #{net_forward.1} parent=1 // pred_check_branch
      %22 = sbr.rel (0) target = $region21
    $region20: #{net_forward.1} parent=1 // pred_region
      _
    $region21: #{net_forward.1} parent=1 // pred_fallthru
      _
    // Predicated region
    $region22: #{net_forward.1} parent=1 // pred_check
      _
    $region23: #{net_forward.1} parent=1 // pred_check_branch
      %24 = sbr.rel (0) target = $region25
    $region24: #{net_forward.1} parent=1 // pred_region
      _
    $region25: #{net_forward.1} parent=1 // pred_fallthru
      _
    // Predicated region
    $region26: #{net_forward.1} parent=1 // pred_check
      _
    $region27: #{net_forward.1} parent=1 // pred_check_branch
      %26 = sbr.rel (0) target = $region29
    $region28: #{net_forward.1} parent=1 // pred_region
      _
    $region29: #{net_forward.1} parent=1 // pred_fallthru
      _
    %v27 = vld [vmem:[%s0] sm:$0xff]
    %v28 = vld [vmem:[%s0 + $0x8] sm:$0xff]
    %v29 = vld [vmem:[%s0 + $0x10] sm:$0xff]
    %v30 = vld [vmem:[%s0 + $0x18] sm:$0xff]
    %v31 = vld [vmem:[%s0 + $0x20] sm:$0xff]
    %v32 = vld [vmem:[%s0 + $0x28] sm:$0xff]
    %v33 = vld [vmem:[%s0 + $0x30] sm:$0xff]
    %v34 = vld [vmem:[%s0 + $0x38] sm:$0xff]
    %v35 = vld [vmem:[%s0 + $0x40] sm:$0xff]
    %v36 = vld [vmem:[%s0 + $0x48] sm:$0xff]
    %v37 = vld [vmem:[%s0 + $0x50] sm:$0xff]
    %v38 = vld [vmem:[%s0 + $0x58] sm:$0xff]
    %v39 = vld [vmem:[%s1] sm:$0xff]
    %v40 = vld [vmem:[%s1 + $0x60] sm:$0xff]
    %v41 = vld [vmem:[%s1 + $0xc0] sm:$0xff]
    %v42 = vld [vmem:[%s1 + $0x120] sm:$0xff]
    %v43 = vld [vmem:[%s1 + $0x180] sm:$0xff]
    %v44 = vld [vmem:[%s1 + $0x1e0] sm:$0xff]
    %v45 = vld [vmem:[%s1 + $0x240] sm:$0xff]
    %v46 = vld [vmem:[%s1 + $0x2a0] sm:$0xff]
    %v47 = vld [vmem:[%s1 + $0x300] sm:$0xff]
    %v48 = vld [vmem:[%s1 + $0x360] sm:$0xff]
    %v49 = vld [vmem:[%s1 + $0x3c0] sm:$0xff]
    %v50 = vld [vmem:[%s1 + $0x420] sm:$0xff]
    %v51 = vld [vmem:[%s1 + $0x480] sm:$0xff]
    %v52 = vld [vmem:[%s1 + $0x4e0] sm:$0xff]
    %v53 = vld [vmem:[%s1 + $0x540] sm:$0xff]
    %v54 = vld [vmem:[%s1 + $0x5a0] sm:$0xff]
    %v55 = vld [vmem:[%s1 + $0x600] sm:$0xff]
    %v56 = vld [vmem:[%s1 + $0x660] sm:$0xff]
    %v57 = vld [vmem:[%s1 + $0x6c0] sm:$0xff]
    %v58 = vld [vmem:[%s1 + $0x720] sm:$0xff]
    %v59 = vld [vmem:[%s1 + $0x780] sm:$0xff]
    %v60 = vld [vmem:[%s1 + $0x7e0] sm:$0xff]
    %v61 = vld [vmem:[%s1 + $0x840] sm:$0xff]
    %v62 = vld [vmem:[%s1 + $0x8a0] sm:$0xff]
    %v63 = vld [vmem:[%s1 + $0x900] sm:$0xff]
    %v64 = vld [vmem:[%s1 + $0x960] sm:$0xff]
    %v65 = vld [vmem:[%s1 + $0x9c0] sm:$0xff]
    %v66 = vld [vmem:[%s1 + $0xa20] sm:$0xff]
    %v67 = vld [vmem:[%s1 + $0xa80] sm:$0xff]
    %v68 = vld [vmem:[%s1 + $0xae0] sm:$0xff]
    %v69 = vld [vmem:[%s1 + $0xb40] sm:$0xff]
    %v70 = vld [vmem:[%s1 + $0xba0] sm:$0xff]
    %v71 = vld [vmem:[%s1 + $0xc00] sm:$0xff]
    %v72 = vld [vmem:[%s1 + $0xc60] sm:$0xff]
    %v73 = vld [vmem:[%s1 + $0xcc0] sm:$0xff]
    %v74 = vld [vmem:[%s1 + $0xd20] sm:$0xff]
    %v75 = vld [vmem:[%s1 + $0xd80] sm:$0xff]
    %v76 = vld [vmem:[%s1 + $0xde0] sm:$0xf]
    %vm77 = vcmask 359424
    %v79 = vsel %vm77, %v29, 0
    %v82 = vsel %vm77, %v32, 0
    %v85 = vsel %vm77, %v35, 0
    %v88 = vsel %vm77, %v38, 0
    %vm90 = vcmask 1043456
    %v92 = vsel %vm90, %v76, 0
    %94 = vmatpush.msra.mxu0 %v54
    %95 = vmatpush.msra.mxu0 %v53
    %96 = vmatpush.msra.mxu0 %v52
    %97 = vmatpush.msra.mxu0 %v51
    %98 = vmatpush.msra.mxu0 %v50
    %99 = vmatpush.msra.mxu0 %v49
    %100 = vmatpush.msra.mxu0 %v48
    %101 = vmatpush.msra.mxu0 %v47
    %102 = vmatpush.msra.mxu0 %v46
    %103 = vmatpush.msra.mxu0 %v45
    %104 = vmatpush.msra.mxu0 %v44
    %105 = vmatpush.msra.mxu0 %v43
    %106 = vmatpush.msra.mxu0 %v42
    %107 = vmatpush.msra.mxu0 %v41
    %108 = vmatpush.msra.mxu0 %v40
    %109 = vmatpush.msra.mxu0 %v39
    %110 = vmatmul.f32.gmra.mxu0 %v27
    %v111 = vpop.f32.mrf.mxu0
    %v112 = vadd.f32 0.0, %v111
    %113 = vmatmul.f32.gmra.mxu0 %v30
    %v114 = vpop.f32.mrf.mxu0
    %v115 = vadd.f32 0.0, %v114
    %116 = vmatmul.f32.gmra.mxu0 %v33
    %v117 = vpop.f32.mrf.mxu0
    %v118 = vadd.f32 0.0, %v117
    %119 = vmatmul.f32.gmra.mxu0 %v36
    %v120 = vpop.f32.mrf.mxu0
    %v121 = vadd.f32 0.0, %v120
    %122 = vdwg.mxu0
    %123 = vmatpush.msra.mxu0 %v70
    %124 = vmatpush.msra.mxu0 %v69
    %125 = vmatpush.msra.mxu0 %v68
    %126 = vmatpush.msra.mxu0 %v67
    %127 = vmatpush.msra.mxu0 %v66
    %128 = vmatpush.msra.mxu0 %v65
    %129 = vmatpush.msra.mxu0 %v64
    %130 = vmatpush.msra.mxu0 %v63
    %131 = vmatpush.msra.mxu0 %v62
    %132 = vmatpush.msra.mxu0 %v61
    %133 = vmatpush.msra.mxu0 %v60
    %134 = vmatpush.msra.mxu0 %v59
    %135 = vmatpush.msra.mxu0 %v58
    %136 = vmatpush.msra.mxu0 %v57
    %137 = vmatpush.msra.mxu0 %v56
    %138 = vmatpush.msra.mxu0 %v55
    %139 = vmatmul.f32.gmra.mxu0 %v28
    %v140 = vpop.f32.mrf.mxu0
    %v141 = vadd.f32 %v112, %v140
    %142 = vmatmul.f32.gmra.mxu0 %v31
    %v143 = vpop.f32.mrf.mxu0
    %v144 = vadd.f32 %v115, %v143
    %145 = vmatmul.f32.gmra.mxu0 %v34
    %v146 = vpop.f32.mrf.mxu0
    %v147 = vadd.f32 %v118, %v146
    %148 = vmatmul.f32.gmra.mxu0 %v37
    %v149 = vpop.f32.mrf.mxu0
    %v150 = vadd.f32 %v121, %v149
    %151 = vdwg.mxu0
    %152 = vmatpush.msra.mxu0 0.0
    %153 = vmatpush.msra.mxu0 0.0
    %154 = vmatpush.msra.mxu0 0.0
    %155 = vmatpush.msra.mxu0 0.0
    %156 = vmatpush.msra.mxu0 0.0
    %157 = vmatpush.msra.mxu0 0.0
    %158 = vmatpush.msra.mxu0 0.0
    %159 = vmatpush.msra.mxu0 0.0
    %160 = vmatpush.msra.mxu0 0.0
    %161 = vmatpush.msra.mxu0 0.0
    %162 = vmatpush.msra.mxu0 %v92
    %163 = vmatpush.msra.mxu0 %v75
    %164 = vmatpush.msra.mxu0 %v74
    %165 = vmatpush.msra.mxu0 %v73
    %166 = vmatpush.msra.mxu0 %v72
    %167 = vmatpush.msra.mxu0 %v71
    %168 = vmatmul.f32.gmra.mxu0 %v79
    %v169 = vpop.f32.mrf.mxu0
    %v170 = vadd.f32 %v141, %v169
    %171 = vmatmul.f32.gmra.mxu0 %v82
    %v172 = vpop.f32.mrf.mxu0
    %v173 = vadd.f32 %v144, %v172
    %174 = vmatmul.f32.gmra.mxu0 %v85
    %v175 = vpop.f32.mrf.mxu0
    %v176 = vadd.f32 %v147, %v175
    %177 = vmatmul.f32.gmra.mxu0 %v88
    %v178 = vpop.f32.mrf.mxu0
    %v179 = vadd.f32 %v150, %v178
    %180 = vdwg.mxu0
    %181 = vst [vmem:[#allocation2] sm:$0xff] %v170
    %182 = vst [vmem:[#allocation2 + $0x8] sm:$0xff] %v173
    %183 = vst [vmem:[#allocation2 + $0x10] sm:$0xff] %v176
    %184 = vst [vmem:[#allocation2 + $0x18] sm:$0xff] %v179
    %v185 = vld [vmem:[#allocation2] sm:$0xff]
    %v186 = vld [vmem:[#allocation2 + $0x8] sm:$0x3f]
    %v187 = vld [vmem:[#allocation2 + $0x10] sm:$0xff]
    %v188 = vld [vmem:[#allocation2 + $0x18] sm:$0x3f]
    %v189 = vld [vmem:[%s1 + $0x8] sm:$0xff]
    %v190 = vld [vmem:[%s1 + $0x68] sm:$0xff]
    %v191 = vld [vmem:[%s1 + $0xc8] sm:$0xff]
    %v192 = vld [vmem:[%s1 + $0x128] sm:$0xff]
    %v193 = vld [vmem:[%s1 + $0x188] sm:$0xff]
    %v194 = vld [vmem:[%s1 + $0x1e8] sm:$0xff]
    %v195 = vld [vmem:[%s1 + $0x248] sm:$0xff]
    %v196 = vld [vmem:[%s1 + $0x2a8] sm:$0xff]
    %v197 = vld [vmem:[%s1 + $0x308] sm:$0xff]
    %v198 = vld [vmem:[%s1 + $0x368] sm:$0xff]
    %v199 = vld [vmem:[%s1 + $0x3c8] sm:$0xff]
    %v200 = vld [vmem:[%s1 + $0x428] sm:$0xff]
    %v201 = vld [vmem:[%s1 + $0x488] sm:$0xff]
    %v202 = vld [vmem:[%s1 + $0x4e8] sm:$0xff]
    %v203 = vld [vmem:[%s1 + $0x548] sm:$0xff]
    %v204 = vld [vmem:[%s1 + $0x5a8] sm:$0xff]
    %v205 = vld [vmem:[%s1 + $0x608] sm:$0xff]
    %v206 = vld [vmem:[%s1 + $0x668] sm:$0xff]
    %v207 = vld [vmem:[%s1 + $0x6c8] sm:$0xff]
    %v208 = vld [vmem:[%s1 + $0x728] sm:$0xff]
    %v209 = vld [vmem:[%s1 + $0x788] sm:$0xff]
    %v210 = vld [vmem:[%s1 + $0x7e8] sm:$0xff]
    %v211 = vld [vmem:[%s1 + $0x848] sm:$0xff]
    %v212 = vld [vmem:[%s1 + $0x8a8] sm:$0xff]
    %v213 = vld [vmem:[%s1 + $0x908] sm:$0xff]
    %v214 = vld [vmem:[%s1 + $0x968] sm:$0xff]
    %v215 = vld [vmem:[%s1 + $0x9c8] sm:$0xff]
    %v216 = vld [vmem:[%s1 + $0xa28] sm:$0xff]
    %v217 = vld [vmem:[%s1 + $0xa88] sm:$0xff]
    %v218 = vld [vmem:[%s1 + $0xae8] sm:$0xff]
    %v219 = vld [vmem:[%s1 + $0xb48] sm:$0xff]
    %v220 = vld [vmem:[%s1 + $0xba8] sm:$0xff]
    %v221 = vld [vmem:[%s1 + $0xc08] sm:$0xff]
    %v222 = vld [vmem:[%s1 + $0xc68] sm:$0xff]
    %v223 = vld [vmem:[%s1 + $0xcc8] sm:$0xff]
    %v224 = vld [vmem:[%s1 + $0xd28] sm:$0xff]
    %v225 = vld [vmem:[%s1 + $0xd88] sm:$0xff]
    %v226 = vld [vmem:[%s1 + $0xde8] sm:$0xf]
    %v228 = vsel %vm90, %v226, 0
    %230 = vmatpush.msra.mxu0 %v204
    %231 = vmatpush.msra.mxu0 %v203
    %232 = vmatpush.msra.mxu0 %v202
    %233 = vmatpush.msra.mxu0 %v201
    %234 = vmatpush.msra.mxu0 %v200
    %235 = vmatpush.msra.mxu0 %v199
    %236 = vmatpush.msra.mxu0 %v198
    %237 = vmatpush.msra.mxu0 %v197
    %238 = vmatpush.msra.mxu0 %v196
    %239 = vmatpush.msra.mxu0 %v195
    %240 = vmatpush.msra.mxu0 %v194
    %241 = vmatpush.msra.mxu0 %v193
    %242 = vmatpush.msra.mxu0 %v192
    %243 = vmatpush.msra.mxu0 %v191
    %244 = vmatpush.msra.mxu0 %v190
    %245 = vmatpush.msra.mxu0 %v189
    %246 = vmatmul.f32.gmra.mxu0 %v27
    %v247 = vpop.f32.mrf.mxu0
    %v248 = vadd.f32 0.0, %v247
    %249 = vmatmul.f32.gmra.mxu0 %v30
    %v250 = vpop.f32.mrf.mxu0
    %v251 = vadd.f32 0.0, %v250
    %252 = vmatmul.f32.gmra.mxu0 %v33
    %v253 = vpop.f32.mrf.mxu0
    %v254 = vadd.f32 0.0, %v253
    %255 = vmatmul.f32.gmra.mxu0 %v36
    %v256 = vpop.f32.mrf.mxu0
    %v257 = vadd.f32 0.0, %v256
    %258 = vdwg.mxu0
    %259 = vmatpush.msra.mxu0 %v220
    %260 = vmatpush.msra.mxu0 %v219
    %261 = vmatpush.msra.mxu0 %v218
    %262 = vmatpush.msra.mxu0 %v217
    %263 = vmatpush.msra.mxu0 %v216
    %264 = vmatpush.msra.mxu0 %v215
    %265 = vmatpush.msra.mxu0 %v214
    %266 = vmatpush.msra.mxu0 %v213
    %267 = vmatpush.msra.mxu0 %v212
    %268 = vmatpush.msra.mxu0 %v211
    %269 = vmatpush.msra.mxu0 %v210
    %270 = vmatpush.msra.mxu0 %v209
    %271 = vmatpush.msra.mxu0 %v208
    %272 = vmatpush.msra.mxu0 %v207
    %273 = vmatpush.msra.mxu0 %v206
    %274 = vmatpush.msra.mxu0 %v205
    %275 = vmatmul.f32.gmra.mxu0 %v28
    %v276 = vpop.f32.mrf.mxu0
    %v277 = vadd.f32 %v248, %v276
    %278 = vmatmul.f32.gmra.mxu0 %v31
    %v279 = vpop.f32.mrf.mxu0
    %v280 = vadd.f32 %v251, %v279
    %281 = vmatmul.f32.gmra.mxu0 %v34
    %v282 = vpop.f32.mrf.mxu0
    %v283 = vadd.f32 %v254, %v282
    %284 = vmatmul.f32.gmra.mxu0 %v37
    %v285 = vpop.f32.mrf.mxu0
    %v286 = vadd.f32 %v257, %v285
    %287 = vdwg.mxu0
    %288 = vmatpush.msra.mxu0 0.0
    %289 = vmatpush.msra.mxu0 0.0
    %290 = vmatpush.msra.mxu0 0.0
    %291 = vmatpush.msra.mxu0 0.0
    %292 = vmatpush.msra.mxu0 0.0
    %293 = vmatpush.msra.mxu0 0.0
    %294 = vmatpush.msra.mxu0 0.0
    %295 = vmatpush.msra.mxu0 0.0
    %296 = vmatpush.msra.mxu0 0.0
    %297 = vmatpush.msra.mxu0 0.0
    %298 = vmatpush.msra.mxu0 %v228
    %299 = vmatpush.msra.mxu0 %v225
    %300 = vmatpush.msra.mxu0 %v224
    %301 = vmatpush.msra.mxu0 %v223
    %302 = vmatpush.msra.mxu0 %v222
    %303 = vmatpush.msra.mxu0 %v221
    %304 = vmatmul.f32.gmra.mxu0 %v79
    %v305 = vpop.f32.mrf.mxu0
    %v306 = vadd.f32 %v277, %v305
    %307 = vmatmul.f32.gmra.mxu0 %v82
    %v308 = vpop.f32.mrf.mxu0
    %v309 = vadd.f32 %v280, %v308
    %310 = vmatmul.f32.gmra.mxu0 %v85
    %v311 = vpop.f32.mrf.mxu0
    %v312 = vadd.f32 %v283, %v311
    %313 = vmatmul.f32.gmra.mxu0 %v88
    %v314 = vpop.f32.mrf.mxu0
    %v315 = vadd.f32 %v286, %v314
    %316 = vdwg.mxu0
    %317 = vst [vmem:[#allocation2] sm:$0xff] %v306
    %318 = vst [vmem:[#allocation2 + $0x8] sm:$0xff] %v309
    %319 = vst [vmem:[#allocation2 + $0x10] sm:$0xff] %v312
    %320 = vst [vmem:[#allocation2 + $0x18] sm:$0xff] %v315
    %v321 = vld [vmem:[#allocation2 + $0x1] sm:$0xff]
    %v322 = vld [vmem:[#allocation2 + $0x9] sm:$0x3f]
    %v323 = vld [vmem:[#allocation2 + $0x11] sm:$0xff]
    %v324 = vld [vmem:[#allocation2 + $0x19] sm:$0x3f]
    %v325 = vadd.f32 %v185, %v321
    %v326 = vadd.f32 %v186, %v322
    %v327 = vadd.f32 %v187, %v323
    %v328 = vadd.f32 %v188, %v324
    %v329 = vld [vmem:[%s1 + $0x10] sm:$0xff]
    %v330 = vld [vmem:[%s1 + $0x70] sm:$0xff]
    %v331 = vld [vmem:[%s1 + $0xd0] sm:$0xff]
    %v332 = vld [vmem:[%s1 + $0x130] sm:$0xff]
    %v333 = vld [vmem:[%s1 + $0x190] sm:$0xff]
    %v334 = vld [vmem:[%s1 + $0x1f0] sm:$0xff]
    %v335 = vld [vmem:[%s1 + $0x250] sm:$0xff]
    %v336 = vld [vmem:[%s1 + $0x2b0] sm:$0xff]
    %v337 = vld [vmem:[%s1 + $0x310] sm:$0xff]
    %v338 = vld [vmem:[%s1 + $0x370] sm:$0xff]
    %v339 = vld [vmem:[%s1 + $0x3d0] sm:$0xff]
    %v340 = vld [vmem:[%s1 + $0x430] sm:$0xff]
    %v341 = vld [vmem:[%s1 + $0x490] sm:$0xff]
    %v342 = vld [vmem:[%s1 + $0x4f0] sm:$0xff]
    %v343 = vld [vmem:[%s1 + $0x550] sm:$0xff]
    %v344 = vld [vmem:[%s1 + $0x5b0] sm:$0xff]
    %v345 = vld [vmem:[%s1 + $0x610] sm:$0xff]
    %v346 = vld [vmem:[%s1 + $0x670] sm:$0xff]
    %v347 = vld [vmem:[%s1 + $0x6d0] sm:$0xff]
    %v348 = vld [vmem:[%s1 + $0x730] sm:$0xff]
    %v349 = vld [vmem:[%s1 + $0x790] sm:$0xff]
    %v350 = vld [vmem:[%s1 + $0x7f0] sm:$0xff]
    %v351 = vld [vmem:[%s1 + $0x850] sm:$0xff]
    %v352 = vld [vmem:[%s1 + $0x8b0] sm:$0xff]
    %v353 = vld [vmem:[%s1 + $0x910] sm:$0xff]
    %v354 = vld [vmem:[%s1 + $0x970] sm:$0xff]
    %v355 = vld [vmem:[%s1 + $0x9d0] sm:$0xff]
    %v356 = vld [vmem:[%s1 + $0xa30] sm:$0xff]
    %v357 = vld [vmem:[%s1 + $0xa90] sm:$0xff]
    %v358 = vld [vmem:[%s1 + $0xaf0] sm:$0xff]
    %v359 = vld [vmem:[%s1 + $0xb50] sm:$0xff]
    %v360 = vld [vmem:[%s1 + $0xbb0] sm:$0xff]
    %v361 = vld [vmem:[%s1 + $0xc10] sm:$0xff]
    %v362 = vld [vmem:[%s1 + $0xc70] sm:$0xff]
    %v363 = vld [vmem:[%s1 + $0xcd0] sm:$0xff]
    %v364 = vld [vmem:[%s1 + $0xd30] sm:$0xff]
    %v365 = vld [vmem:[%s1 + $0xd90] sm:$0xff]
    %v366 = vld [vmem:[%s1 + $0xdf0] sm:$0xf]
    %v368 = vsel %vm90, %v366, 0
    %370 = vmatpush.msra.mxu0 %v344
    %371 = vmatpush.msra.mxu0 %v343
    %372 = vmatpush.msra.mxu0 %v342
    %373 = vmatpush.msra.mxu0 %v341
    %374 = vmatpush.msra.mxu0 %v340
    %375 = vmatpush.msra.mxu0 %v339
    %376 = vmatpush.msra.mxu0 %v338
    %377 = vmatpush.msra.mxu0 %v337
    %378 = vmatpush.msra.mxu0 %v336
    %379 = vmatpush.msra.mxu0 %v335
    %380 = vmatpush.msra.mxu0 %v334
    %381 = vmatpush.msra.mxu0 %v333
    %382 = vmatpush.msra.mxu0 %v332
    %383 = vmatpush.msra.mxu0 %v331
    %384 = vmatpush.msra.mxu0 %v330
    %385 = vmatpush.msra.mxu0 %v329
    %386 = vmatmul.f32.gmra.mxu0 %v27
    %v387 = vpop.f32.mrf.mxu0
    %v388 = vadd.f32 0.0, %v387
    %389 = vmatmul.f32.gmra.mxu0 %v30
    %v390 = vpop.f32.mrf.mxu0
    %v391 = vadd.f32 0.0, %v390
    %392 = vmatmul.f32.gmra.mxu0 %v33
    %v393 = vpop.f32.mrf.mxu0
    %v394 = vadd.f32 0.0, %v393
    %395 = vmatmul.f32.gmra.mxu0 %v36
    %v396 = vpop.f32.mrf.mxu0
    %v397 = vadd.f32 0.0, %v396
    %398 = vdwg.mxu0
    %399 = vmatpush.msra.mxu0 %v360
    %400 = vmatpush.msra.mxu0 %v359
    %401 = vmatpush.msra.mxu0 %v358
    %402 = vmatpush.msra.mxu0 %v357
    %403 = vmatpush.msra.mxu0 %v356
    %404 = vmatpush.msra.mxu0 %v355
    %405 = vmatpush.msra.mxu0 %v354
    %406 = vmatpush.msra.mxu0 %v353
    %407 = vmatpush.msra.mxu0 %v352
    %408 = vmatpush.msra.mxu0 %v351
    %409 = vmatpush.msra.mxu0 %v350
    %410 = vmatpush.msra.mxu0 %v349
    %411 = vmatpush.msra.mxu0 %v348
    %412 = vmatpush.msra.mxu0 %v347
    %413 = vmatpush.msra.mxu0 %v346
    %414 = vmatpush.msra.mxu0 %v345
    %415 = vmatmul.f32.gmra.mxu0 %v28
    %v416 = vpop.f32.mrf.mxu0
    %v417 = vadd.f32 %v388, %v416
    %418 = vmatmul.f32.gmra.mxu0 %v31
    %v419 = vpop.f32.mrf.mxu0
    %v420 = vadd.f32 %v391, %v419
    %421 = vmatmul.f32.gmra.mxu0 %v34
    %v422 = vpop.f32.mrf.mxu0
    %v423 = vadd.f32 %v394, %v422
    %424 = vmatmul.f32.gmra.mxu0 %v37
    %v425 = vpop.f32.mrf.mxu0
    %v426 = vadd.f32 %v397, %v425
    %427 = vdwg.mxu0
    %428 = vmatpush.msra.mxu0 0.0
    %429 = vmatpush.msra.mxu0 0.0
    %430 = vmatpush.msra.mxu0 0.0
    %431 = vmatpush.msra.mxu0 0.0
    %432 = vmatpush.msra.mxu0 0.0
    %433 = vmatpush.msra.mxu0 0.0
    %434 = vmatpush.msra.mxu0 0.0
    %435 = vmatpush.msra.mxu0 0.0
    %436 = vmatpush.msra.mxu0 0.0
    %437 = vmatpush.msra.mxu0 0.0
    %438 = vmatpush.msra.mxu0 %v368
    %439 = vmatpush.msra.mxu0 %v365
    %440 = vmatpush.msra.mxu0 %v364
    %441 = vmatpush.msra.mxu0 %v363
    %442 = vmatpush.msra.mxu0 %v362
    %443 = vmatpush.msra.mxu0 %v361
    %444 = vmatmul.f32.gmra.mxu0 %v79
    %v445 = vpop.f32.mrf.mxu0
    %v446 = vadd.f32 %v417, %v445
    %447 = vmatmul.f32.gmra.mxu0 %v82
    %v448 = vpop.f32.mrf.mxu0
    %v449 = vadd.f32 %v420, %v448
    %450 = vmatmul.f32.gmra.mxu0 %v85
    %v451 = vpop.f32.mrf.mxu0
    %v452 = vadd.f32 %v423, %v451
    %453 = vmatmul.f32.gmra.mxu0 %v88
    %v454 = vpop.f32.mrf.mxu0
    %v455 = vadd.f32 %v426, %v454
    %456 = vdwg.mxu0
    %457 = vst [vmem:[#allocation2] sm:$0xff] %v446
    %458 = vst [vmem:[#allocation2 + $0x8] sm:$0xff] %v449
    %459 = vst [vmem:[#allocation2 + $0x10] sm:$0xff] %v452
    %460 = vst [vmem:[#allocation2 + $0x18] sm:$0xff] %v455
    %v461 = vld [vmem:[#allocation2 + $0x2] sm:$0xff]
    %v462 = vld [vmem:[#allocation2 + $0xa] sm:$0x3f]
    %v463 = vld [vmem:[#allocation2 + $0x12] sm:$0xff]
    %v464 = vld [vmem:[#allocation2 + $0x1a] sm:$0x3f]
    %v465 = vadd.f32 %v325, %v461
    %v466 = vadd.f32 %v326, %v462
    %v467 = vadd.f32 %v327, %v463
    %v468 = vadd.f32 %v328, %v464
    %vm469 = vcmask 1045504
    %v470 = vsel %vm469, %v466, -inf
    %v471 = vmax.f32 %v465, %v470
    %v472 = vrot.slane %v471, 4
    %v473 = vmax.f32 %v471, %v472
    %v474 = vrot.slane %v473, 2
    %v475 = vmax.f32 %v473, %v474
    %v476 = vrot.slane %v475, 1
    %v477 = vmax.f32 %v475, %v476
    %v478 = vsel %vm469, %v468, -inf
    %v479 = vmax.f32 %v467, %v478
    %v480 = vrot.slane %v479, 4
    %v481 = vmax.f32 %v479, %v480
    %v482 = vrot.slane %v481, 2
    %v483 = vmax.f32 %v481, %v482
    %v484 = vrot.slane %v483, 1
    %v485 = vmax.f32 %v483, %v484
    %v486 = vld [vmem:[%s1 + $0x18] sm:$0xff]
    %v487 = vld [vmem:[%s1 + $0x78] sm:$0xff]
    %v488 = vld [vmem:[%s1 + $0xd8] sm:$0xff]
    %v489 = vld [vmem:[%s1 + $0x138] sm:$0xff]
    %v490 = vld [vmem:[%s1 + $0x198] sm:$0xff]
    %v491 = vld [vmem:[%s1 + $0x1f8] sm:$0xff]
    %v492 = vld [vmem:[%s1 + $0x258] sm:$0xff]
    %v493 = vld [vmem:[%s1 + $0x2b8] sm:$0xff]
    %v494 = vld [vmem:[%s1 + $0x318] sm:$0xff]
    %v495 = vld [vmem:[%s1 + $0x378] sm:$0xff]
    %v496 = vld [vmem:[%s1 + $0x3d8] sm:$0xff]
    %v497 = vld [vmem:[%s1 + $0x438] sm:$0xff]
    %v498 = vld [vmem:[%s1 + $0x498] sm:$0xff]
    %v499 = vld [vmem:[%s1 + $0x4f8] sm:$0xff]
    %v500 = vld [vmem:[%s1 + $0x558] sm:$0xff]
    %v501 = vld [vmem:[%s1 + $0x5b8] sm:$0xff]
    %v502 = vld [vmem:[%s1 + $0x618] sm:$0xff]
    %v503 = vld [vmem:[%s1 + $0x678] sm:$0xff]
    %v504 = vld [vmem:[%s1 + $0x6d8] sm:$0xff]
    %v505 = vld [vmem:[%s1 + $0x738] sm:$0xff]
    %v506 = vld [vmem:[%s1 + $0x798] sm:$0xff]
    %v507 = vld [vmem:[%s1 + $0x7f8] sm:$0xff]
    %v508 = vld [vmem:[%s1 + $0x858] sm:$0xff]
    %v509 = vld [vmem:[%s1 + $0x8b8] sm:$0xff]
    %v510 = vld [vmem:[%s1 + $0x918] sm:$0xff]
    %v511 = vld [vmem:[%s1 + $0x978] sm:$0xff]
    %v512 = vld [vmem:[%s1 + $0x9d8] sm:$0xff]
    %v513 = vld [vmem:[%s1 + $0xa38] sm:$0xff]
    %v514 = vld [vmem:[%s1 + $0xa98] sm:$0xff]
    %v515 = vld [vmem:[%s1 + $0xaf8] sm:$0xff]
    %v516 = vld [vmem:[%s1 + $0xb58] sm:$0xff]
    %v517 = vld [vmem:[%s1 + $0xbb8] sm:$0xff]
    %v518 = vld [vmem:[%s1 + $0xc18] sm:$0xff]
    %v519 = vld [vmem:[%s1 + $0xc78] sm:$0xff]
    %v520 = vld [vmem:[%s1 + $0xcd8] sm:$0xff]
    %v521 = vld [vmem:[%s1 + $0xd38] sm:$0xff]
    %v522 = vld [vmem:[%s1 + $0xd98] sm:$0xff]
    %v523 = vld [vmem:[%s1 + $0xdf8] sm:$0xf]
    %v525 = vsel %vm90, %v523, 0
    %527 = vmatpush.msra.mxu0 %v501
    %528 = vmatpush.msra.mxu0 %v500
    %529 = vmatpush.msra.mxu0 %v499
    %530 = vmatpush.msra.mxu0 %v498
    %531 = vmatpush.msra.mxu0 %v497
    %532 = vmatpush.msra.mxu0 %v496
    %533 = vmatpush.msra.mxu0 %v495
    %534 = vmatpush.msra.mxu0 %v494
    %535 = vmatpush.msra.mxu0 %v493
    %536 = vmatpush.msra.mxu0 %v492
    %537 = vmatpush.msra.mxu0 %v491
    %538 = vmatpush.msra.mxu0 %v490
    %539 = vmatpush.msra.mxu0 %v489
    %540 = vmatpush.msra.mxu0 %v488
    %541 = vmatpush.msra.mxu0 %v487
    %542 = vmatpush.msra.mxu0 %v486
    %543 = vmatmul.f32.gmra.mxu0 %v27
    %v544 = vpop.f32.mrf.mxu0
    %v545 = vadd.f32 0.0, %v544
    %546 = vmatmul.f32.gmra.mxu0 %v30
    %v547 = vpop.f32.mrf.mxu0
    %v548 = vadd.f32 0.0, %v547
    %549 = vmatmul.f32.gmra.mxu0 %v33
    %v550 = vpop.f32.mrf.mxu0
    %v551 = vadd.f32 0.0, %v550
    %552 = vmatmul.f32.gmra.mxu0 %v36
    %v553 = vpop.f32.mrf.mxu0
    %v554 = vadd.f32 0.0, %v553
    %555 = vdwg.mxu0
    %556 = vmatpush.msra.mxu0 %v517
    %557 = vmatpush.msra.mxu0 %v516
    %558 = vmatpush.msra.mxu0 %v515
    %559 = vmatpush.msra.mxu0 %v514
    %560 = vmatpush.msra.mxu0 %v513
    %561 = vmatpush.msra.mxu0 %v512
    %562 = vmatpush.msra.mxu0 %v511
    %563 = vmatpush.msra.mxu0 %v510
    %564 = vmatpush.msra.mxu0 %v509
    %565 = vmatpush.msra.mxu0 %v508
    %566 = vmatpush.msra.mxu0 %v507
    %567 = vmatpush.msra.mxu0 %v506
    %568 = vmatpush.msra.mxu0 %v505
    %569 = vmatpush.msra.mxu0 %v504
    %570 = vmatpush.msra.mxu0 %v503
    %571 = vmatpush.msra.mxu0 %v502
    %572 = vmatmul.f32.gmra.mxu0 %v28
    %v573 = vpop.f32.mrf.mxu0
    %v574 = vadd.f32 %v545, %v573
    %575 = vmatmul.f32.gmra.mxu0 %v31
    %v576 = vpop.f32.mrf.mxu0
    %v577 = vadd.f32 %v548, %v576
    %578 = vmatmul.f32.gmra.mxu0 %v34
    %v579 = vpop.f32.mrf.mxu0
    %v580 = vadd.f32 %v551, %v579
    %581 = vmatmul.f32.gmra.mxu0 %v37
    %v582 = vpop.f32.mrf.mxu0
    %v583 = vadd.f32 %v554, %v582
    %584 = vdwg.mxu0
    %585 = vmatpush.msra.mxu0 0.0
    %586 = vmatpush.msra.mxu0 0.0
    %587 = vmatpush.msra.mxu0 0.0
    %588 = vmatpush.msra.mxu0 0.0
    %589 = vmatpush.msra.mxu0 0.0
    %590 = vmatpush.msra.mxu0 0.0
    %591 = vmatpush.msra.mxu0 0.0
    %592 = vmatpush.msra.mxu0 0.0
    %593 = vmatpush.msra.mxu0 0.0
    %594 = vmatpush.msra.mxu0 0.0
    %595 = vmatpush.msra.mxu0 %v525
    %596 = vmatpush.msra.mxu0 %v522
    %597 = vmatpush.msra.mxu0 %v521
    %598 = vmatpush.msra.mxu0 %v520
    %599 = vmatpush.msra.mxu0 %v519
    %600 = vmatpush.msra.mxu0 %v518
    %601 = vmatmul.f32.gmra.mxu0 %v79
    %v602 = vpop.f32.mrf.mxu0
    %v603 = vadd.f32 %v574, %v602
    %604 = vmatmul.f32.gmra.mxu0 %v82
    %v605 = vpop.f32.mrf.mxu0
    %v606 = vadd.f32 %v577, %v605
    %607 = vmatmul.f32.gmra.mxu0 %v85
    %v608 = vpop.f32.mrf.mxu0
    %v609 = vadd.f32 %v580, %v608
    %610 = vmatmul.f32.gmra.mxu0 %v88
    %v611 = vpop.f32.mrf.mxu0
    %v612 = vadd.f32 %v583, %v611
    %613 = vdwg.mxu0
    %614 = vst [vmem:[#allocation2] sm:$0xff] %v603
    %615 = vst [vmem:[#allocation2 + $0x8] sm:$0xff] %v606
    %616 = vst [vmem:[#allocation2 + $0x10] sm:$0xff] %v609
    %617 = vst [vmem:[#allocation2 + $0x18] sm:$0xff] %v612
    %v618 = vld [vmem:[#allocation2] sm:$0xff]
    %v619 = vld [vmem:[#allocation2 + $0x8] sm:$0x1f]
    %v620 = vld [vmem:[#allocation2 + $0x10] sm:$0xff]
    %v621 = vld [vmem:[#allocation2 + $0x18] sm:$0x1f]
    %v622 = vld [vmem:[%s1 + $0x20] sm:$0xff]
    %v623 = vld [vmem:[%s1 + $0x80] sm:$0xff]
    %v624 = vld [vmem:[%s1 + $0xe0] sm:$0xff]
    %v625 = vld [vmem:[%s1 + $0x140] sm:$0xff]
    %v626 = vld [vmem:[%s1 + $0x1a0] sm:$0xff]
    %v627 = vld [vmem:[%s1 + $0x200] sm:$0xff]
    %v628 = vld [vmem:[%s1 + $0x260] sm:$0xff]
    %v629 = vld [vmem:[%s1 + $0x2c0] sm:$0xff]
    %v630 = vld [vmem:[%s1 + $0x320] sm:$0xff]
    %v631 = vld [vmem:[%s1 + $0x380] sm:$0xff]
    %v632 = vld [vmem:[%s1 + $0x3e0] sm:$0xff]
    %v633 = vld [vmem:[%s1 + $0x440] sm:$0xff]
    %v634 = vld [vmem:[%s1 + $0x4a0] sm:$0xff]
    %v635 = vld [vmem:[%s1 + $0x500] sm:$0xff]
    %v636 = vld [vmem:[%s1 + $0x560] sm:$0xff]
    %v637 = vld [vmem:[%s1 + $0x5c0] sm:$0xff]
    %v638 = vld [vmem:[%s1 + $0x620] sm:$0xff]
    %v639 = vld [vmem:[%s1 + $0x680] sm:$0xff]
    %v640 = vld [vmem:[%s1 + $0x6e0] sm:$0xff]
    %v641 = vld [vmem:[%s1 + $0x740] sm:$0xff]
    %v642 = vld [vmem:[%s1 + $0x7a0] sm:$0xff]
    %v643 = vld [vmem:[%s1 + $0x800] sm:$0xff]
    %v644 = vld [vmem:[%s1 + $0x860] sm:$0xff]
    %v645 = vld [vmem:[%s1 + $0x8c0] sm:$0xff]
    %v646 = vld [vmem:[%s1 + $0x920] sm:$0xff]
    %v647 = vld [vmem:[%s1 + $0x980] sm:$0xff]
    %v648 = vld [vmem:[%s1 + $0x9e0] sm:$0xff]
    %v649 = vld [vmem:[%s1 + $0xa40] sm:$0xff]
    %v650 = vld [vmem:[%s1 + $0xaa0] sm:$0xff]
    %v651 = vld [vmem:[%s1 + $0xb00] sm:$0xff]
    %v652 = vld [vmem:[%s1 + $0xb60] sm:$0xff]
    %v653 = vld [vmem:[%s1 + $0xbc0] sm:$0xff]
    %v654 = vld [vmem:[%s1 + $0xc20] sm:$0xff]
    %v655 = vld [vmem:[%s1 + $0xc80] sm:$0xff]
    %v656 = vld [vmem:[%s1 + $0xce0] sm:$0xff]
    %v657 = vld [vmem:[%s1 + $0xd40] sm:$0xff]
    %v658 = vld [vmem:[%s1 + $0xda0] sm:$0xff]
    %v659 = vld [vmem:[%s1 + $0xe00] sm:$0xf]
    %v661 = vsel %vm90, %v659, 0
    %663 = vmatpush.msra.mxu0 %v637
    %664 = vmatpush.msra.mxu0 %v636
    %665 = vmatpush.msra.mxu0 %v635
    %666 = vmatpush.msra.mxu0 %v634
    %667 = vmatpush.msra.mxu0 %v633
    %668 = vmatpush.msra.mxu0 %v632
    %669 = vmatpush.msra.mxu0 %v631
    %670 = vmatpush.msra.mxu0 %v630
    %671 = vmatpush.msra.mxu0 %v629
    %672 = vmatpush.msra.mxu0 %v628
    %673 = vmatpush.msra.mxu0 %v627
    %674 = vmatpush.msra.mxu0 %v626
    %675 = vmatpush.msra.mxu0 %v625
    %676 = vmatpush.msra.mxu0 %v624
    %677 = vmatpush.msra.mxu0 %v623
    %678 = vmatpush.msra.mxu0 %v622
    %679 = vmatmul.f32.gmra.mxu0 %v27
    %v680 = vpop.f32.mrf.mxu0
    %v681 = vadd.f32 0.0, %v680
    %682 = vmatmul.f32.gmra.mxu0 %v30
    %v683 = vpop.f32.mrf.mxu0
    %v684 = vadd.f32 0.0, %v683
    %685 = vmatmul.f32.gmra.mxu0 %v33
    %v686 = vpop.f32.mrf.mxu0
    %v687 = vadd.f32 0.0, %v686
    %688 = vmatmul.f32.gmra.mxu0 %v36
    %v689 = vpop.f32.mrf.mxu0
    %v690 = vadd.f32 0.0, %v689
    %691 = vdwg.mxu0
    %692 = vmatpush.msra.mxu0 %v653
    %693 = vmatpush.msra.mxu0 %v652
    %694 = vmatpush.msra.mxu0 %v651
    %695 = vmatpush.msra.mxu0 %v650
    %696 = vmatpush.msra.mxu0 %v649
    %697 = vmatpush.msra.mxu0 %v648
    %698 = vmatpush.msra.mxu0 %v647
    %699 = vmatpush.msra.mxu0 %v646
    %700 = vmatpush.msra.mxu0 %v645
    %701 = vmatpush.msra.mxu0 %v644
    %702 = vmatpush.msra.mxu0 %v643
    %703 = vmatpush.msra.mxu0 %v642
    %704 = vmatpush.msra.mxu0 %v641
    %705 = vmatpush.msra.mxu0 %v640
    %706 = vmatpush.msra.mxu0 %v639
    %707 = vmatpush.msra.mxu0 %v638
    %708 = vmatmul.f32.gmra.mxu0 %v28
    %v709 = vpop.f32.mrf.mxu0
    %v710 = vadd.f32 %v681, %v709
    %711 = vmatmul.f32.gmra.mxu0 %v31
    %v712 = vpop.f32.mrf.mxu0
    %v713 = vadd.f32 %v684, %v712
    %714 = vmatmul.f32.gmra.mxu0 %v34
    %v715 = vpop.f32.mrf.mxu0
    %v716 = vadd.f32 %v687, %v715
    %717 = vmatmul.f32.gmra.mxu0 %v37
    %v718 = vpop.f32.mrf.mxu0
    %v719 = vadd.f32 %v690, %v718
    %720 = vdwg.mxu0
    %721 = vmatpush.msra.mxu0 0.0
    %722 = vmatpush.msra.mxu0 0.0
    %723 = vmatpush.msra.mxu0 0.0
    %724 = vmatpush.msra.mxu0 0.0
    %725 = vmatpush.msra.mxu0 0.0
    %726 = vmatpush.msra.mxu0 0.0
    %727 = vmatpush.msra.mxu0 0.0
    %728 = vmatpush.msra.mxu0 0.0
    %729 = vmatpush.msra.mxu0 0.0
    %730 = vmatpush.msra.mxu0 0.0
    %731 = vmatpush.msra.mxu0 %v661
    %732 = vmatpush.msra.mxu0 %v658
    %733 = vmatpush.msra.mxu0 %v657
    %734 = vmatpush.msra.mxu0 %v656
    %735 = vmatpush.msra.mxu0 %v655
    %736 = vmatpush.msra.mxu0 %v654
    %737 = vmatmul.f32.gmra.mxu0 %v79
    %v738 = vpop.f32.mrf.mxu0
    %v739 = vadd.f32 %v710, %v738
    %740 = vmatmul.f32.gmra.mxu0 %v82
    %v741 = vpop.f32.mrf.mxu0
    %v742 = vadd.f32 %v713, %v741
    %743 = vmatmul.f32.gmra.mxu0 %v85
    %v744 = vpop.f32.mrf.mxu0
    %v745 = vadd.f32 %v716, %v744
    %746 = vmatmul.f32.gmra.mxu0 %v88
    %v747 = vpop.f32.mrf.mxu0
    %v748 = vadd.f32 %v719, %v747
    %749 = vdwg.mxu0
    %750 = vst [vmem:[#allocation2] sm:$0xff] %v739
    %751 = vst [vmem:[#allocation2 + $0x8] sm:$0xff] %v742
    %752 = vst [vmem:[#allocation2 + $0x10] sm:$0xff] %v745
    %753 = vst [vmem:[#allocation2 + $0x18] sm:$0xff] %v748
    %v754 = vld [vmem:[#allocation2 + $0x1] sm:$0xff]
    %v755 = vld [vmem:[#allocation2 + $0x9] sm:$0x1f]
    %v756 = vld [vmem:[#allocation2 + $0x11] sm:$0xff]
    %v757 = vld [vmem:[#allocation2 + $0x19] sm:$0x1f]
    %v758 = vadd.f32 %v618, %v754
    %v759 = vadd.f32 %v619, %v755
    %v760 = vadd.f32 %v620, %v756
    %v761 = vadd.f32 %v621, %v757
    %v762 = vld [vmem:[%s1 + $0x28] sm:$0xff]
    %v763 = vld [vmem:[%s1 + $0x88] sm:$0xff]
    %v764 = vld [vmem:[%s1 + $0xe8] sm:$0xff]
    %v765 = vld [vmem:[%s1 + $0x148] sm:$0xff]
    %v766 = vld [vmem:[%s1 + $0x1a8] sm:$0xff]
    %v767 = vld [vmem:[%s1 + $0x208] sm:$0xff]
    %v768 = vld [vmem:[%s1 + $0x268] sm:$0xff]
    %v769 = vld [vmem:[%s1 + $0x2c8] sm:$0xff]
    %v770 = vld [vmem:[%s1 + $0x328] sm:$0xff]
    %v771 = vld [vmem:[%s1 + $0x388] sm:$0xff]
    %v772 = vld [vmem:[%s1 + $0x3e8] sm:$0xff]
    %v773 = vld [vmem:[%s1 + $0x448] sm:$0xff]
    %v774 = vld [vmem:[%s1 + $0x4a8] sm:$0xff]
    %v775 = vld [vmem:[%s1 + $0x508] sm:$0xff]
    %v776 = vld [vmem:[%s1 + $0x568] sm:$0xff]
    %v777 = vld [vmem:[%s1 + $0x5c8] sm:$0xff]
    %v778 = vld [vmem:[%s1 + $0x628] sm:$0xff]
    %v779 = vld [vmem:[%s1 + $0x688] sm:$0xff]
    %v780 = vld [vmem:[%s1 + $0x6e8] sm:$0xff]
    %v781 = vld [vmem:[%s1 + $0x748] sm:$0xff]
    %v782 = vld [vmem:[%s1 + $0x7a8] sm:$0xff]
    %v783 = vld [vmem:[%s1 + $0x808] sm:$0xff]
    %v784 = vld [vmem:[%s1 + $0x868] sm:$0xff]
    %v785 = vld [vmem:[%s1 + $0x8c8] sm:$0xff]
    %v786 = vld [vmem:[%s1 + $0x928] sm:$0xff]
    %v787 = vld [vmem:[%s1 + $0x988] sm:$0xff]
    %v788 = vld [vmem:[%s1 + $0x9e8] sm:$0xff]
    %v789 = vld [vmem:[%s1 + $0xa48] sm:$0xff]
    %v790 = vld [vmem:[%s1 + $0xaa8] sm:$0xff]
    %v791 = vld [vmem:[%s1 + $0xb08] sm:$0xff]
    %v792 = vld [vmem:[%s1 + $0xb68] sm:$0xff]
    %v793 = vld [vmem:[%s1 + $0xbc8] sm:$0xff]
    %v794 = vld [vmem:[%s1 + $0xc28] sm:$0xff]
    %v795 = vld [vmem:[%s1 + $0xc88] sm:$0xff]
    %v796 = vld [vmem:[%s1 + $0xce8] sm:$0xff]
    %v797 = vld [vmem:[%s1 + $0xd48] sm:$0xff]
    %v798 = vld [vmem:[%s1 + $0xda8] sm:$0xff]
    %v799 = vld [vmem:[%s1 + $0xe08] sm:$0xf]
    %v801 = vsel %vm90, %v799, 0
    %803 = vmatpush.msra.mxu0 %v777
    %804 = vmatpush.msra.mxu0 %v776
    %805 = vmatpush.msra.mxu0 %v775
    %806 = vmatpush.msra.mxu0 %v774
    %807 = vmatpush.msra.mxu0 %v773
    %808 = vmatpush.msra.mxu0 %v772
    %809 = vmatpush.msra.mxu0 %v771
    %810 = vmatpush.msra.mxu0 %v770
    %811 = vmatpush.msra.mxu0 %v769
    %812 = vmatpush.msra.mxu0 %v768
    %813 = vmatpush.msra.mxu0 %v767
    %814 = vmatpush.msra.mxu0 %v766
    %815 = vmatpush.msra.mxu0 %v765
    %816 = vmatpush.msra.mxu0 %v764
    %817 = vmatpush.msra.mxu0 %v763
    %818 = vmatpush.msra.mxu0 %v762
    %819 = vmatmul.f32.gmra.mxu0 %v27
    %v820 = vpop.f32.mrf.mxu0
    %v821 = vadd.f32 0.0, %v820
    %822 = vmatmul.f32.gmra.mxu0 %v30
    %v823 = vpop.f32.mrf.mxu0
    %v824 = vadd.f32 0.0, %v823
    %825 = vmatmul.f32.gmra.mxu0 %v33
    %v826 = vpop.f32.mrf.mxu0
    %v827 = vadd.f32 0.0, %v826
    %828 = vmatmul.f32.gmra.mxu0 %v36
    %v829 = vpop.f32.mrf.mxu0
    %v830 = vadd.f32 0.0, %v829
    %831 = vdwg.mxu0
    %832 = vmatpush.msra.mxu0 %v793
    %833 = vmatpush.msra.mxu0 %v792
    %834 = vmatpush.msra.mxu0 %v791
    %835 = vmatpush.msra.mxu0 %v790
    %836 = vmatpush.msra.mxu0 %v789
    %837 = vmatpush.msra.mxu0 %v788
    %838 = vmatpush.msra.mxu0 %v787
    %839 = vmatpush.msra.mxu0 %v786
    %840 = vmatpush.msra.mxu0 %v785
    %841 = vmatpush.msra.mxu0 %v784
    %842 = vmatpush.msra.mxu0 %v783
    %843 = vmatpush.msra.mxu0 %v782
    %844 = vmatpush.msra.mxu0 %v781
    %845 = vmatpush.msra.mxu0 %v780
    %846 = vmatpush.msra.mxu0 %v779
    %847 = vmatpush.msra.mxu0 %v778
    %848 = vmatmul.f32.gmra.mxu0 %v28
    %v849 = vpop.f32.mrf.mxu0
    %v850 = vadd.f32 %v821, %v849
    %851 = vmatmul.f32.gmra.mxu0 %v31
    %v852 = vpop.f32.mrf.mxu0
    %v853 = vadd.f32 %v824, %v852
    %854 = vmatmul.f32.gmra.mxu0 %v34
    %v855 = vpop.f32.mrf.mxu0
    %v856 = vadd.f32 %v827, %v855
    %857 = vmatmul.f32.gmra.mxu0 %v37
    %v858 = vpop.f32.mrf.mxu0
    %v859 = vadd.f32 %v830, %v858
    %860 = vdwg.mxu0
    %861 = vmatpush.msra.mxu0 0.0
    %862 = vmatpush.msra.mxu0 0.0
    %863 = vmatpush.msra.mxu0 0.0
    %864 = vmatpush.msra.mxu0 0.0
    %865 = vmatpush.msra.mxu0 0.0
    %866 = vmatpush.msra.mxu0 0.0
    %867 = vmatpush.msra.mxu0 0.0
    %868 = vmatpush.msra.mxu0 0.0
    %869 = vmatpush.msra.mxu0 0.0
    %870 = vmatpush.msra.mxu0 0.0
    %871 = vmatpush.msra.mxu0 %v801
    %872 = vmatpush.msra.mxu0 %v798
    %873 = vmatpush.msra.mxu0 %v797
    %874 = vmatpush.msra.mxu0 %v796
    %875 = vmatpush.msra.mxu0 %v795
    %876 = vmatpush.msra.mxu0 %v794
    %877 = vmatmul.f32.gmra.mxu0 %v79
    %v878 = vpop.f32.mrf.mxu0
    %v879 = vadd.f32 %v850, %v878
    %880 = vmatmul.f32.gmra.mxu0 %v82
    %v881 = vpop.f32.mrf.mxu0
    %v882 = vadd.f32 %v853, %v881
    %883 = vmatmul.f32.gmra.mxu0 %v85
    %v884 = vpop.f32.mrf.mxu0
    %v885 = vadd.f32 %v856, %v884
    %886 = vmatmul.f32.gmra.mxu0 %v88
    %v887 = vpop.f32.mrf.mxu0
    %v888 = vadd.f32 %v859, %v887
    %889 = vdwg.mxu0
    %890 = vst [vmem:[#allocation2] sm:$0xff] %v879
    %891 = vst [vmem:[#allocation2 + $0x8] sm:$0xff] %v882
    %892 = vst [vmem:[#allocation2 + $0x10] sm:$0xff] %v885
    %893 = vst [vmem:[#allocation2 + $0x18] sm:$0xff] %v888
    %v894 = vld [vmem:[#allocation2 + $0x2] sm:$0xff]
    %v895 = vld [vmem:[#allocation2 + $0xa] sm:$0x1f]
    %v896 = vld [vmem:[#allocation2 + $0x12] sm:$0xff]
    %v897 = vld [vmem:[#allocation2 + $0x1a] sm:$0x1f]
    %v898 = vadd.f32 %v758, %v894
    %v899 = vadd.f32 %v759, %v895
    %v900 = vadd.f32 %v760, %v896
    %v901 = vadd.f32 %v761, %v897
    %v902 = vld [vmem:[%s1 + $0x30] sm:$0xff]
    %v903 = vld [vmem:[%s1 + $0x90] sm:$0xff]
    %v904 = vld [vmem:[%s1 + $0xf0] sm:$0xff]
    %v905 = vld [vmem:[%s1 + $0x150] sm:$0xff]
    %v906 = vld [vmem:[%s1 + $0x1b0] sm:$0xff]
    %v907 = vld [vmem:[%s1 + $0x210] sm:$0xff]
    %v908 = vld [vmem:[%s1 + $0x270] sm:$0xff]
    %v909 = vld [vmem:[%s1 + $0x2d0] sm:$0xff]
    %v910 = vld [vmem:[%s1 + $0x330] sm:$0xff]
    %v911 = vld [vmem:[%s1 + $0x390] sm:$0xff]
    %v912 = vld [vmem:[%s1 + $0x3f0] sm:$0xff]
    %v913 = vld [vmem:[%s1 + $0x450] sm:$0xff]
    %v914 = vld [vmem:[%s1 + $0x4b0] sm:$0xff]
    %v915 = vld [vmem:[%s1 + $0x510] sm:$0xff]
    %v916 = vld [vmem:[%s1 + $0x570] sm:$0xff]
    %v917 = vld [vmem:[%s1 + $0x5d0] sm:$0xff]
    %v918 = vld [vmem:[%s1 + $0x630] sm:$0xff]
    %v919 = vld [vmem:[%s1 + $0x690] sm:$0xff]
    %v920 = vld [vmem:[%s1 + $0x6f0] sm:$0xff]
    %v921 = vld [vmem:[%s1 + $0x750] sm:$0xff]
    %v922 = vld [vmem:[%s1 + $0x7b0] sm:$0xff]
    %v923 = vld [vmem:[%s1 + $0x810] sm:$0xff]
    %v924 = vld [vmem:[%s1 + $0x870] sm:$0xff]
    %v925 = vld [vmem:[%s1 + $0x8d0] sm:$0xff]
    %v926 = vld [vmem:[%s1 + $0x930] sm:$0xff]
    %v927 = vld [vmem:[%s1 + $0x990] sm:$0xff]
    %v928 = vld [vmem:[%s1 + $0x9f0] sm:$0xff]
    %v929 = vld [vmem:[%s1 + $0xa50] sm:$0xff]
    %v930 = vld [vmem:[%s1 + $0xab0] sm:$0xff]
    %v931 = vld [vmem:[%s1 + $0xb10] sm:$0xff]
    %v932 = vld [vmem:[%s1 + $0xb70] sm:$0xff]
    %v933 = vld [vmem:[%s1 + $0xbd0] sm:$0xff]
    %v934 = vld [vmem:[%s1 + $0xc30] sm:$0xff]
    %v935 = vld [vmem:[%s1 + $0xc90] sm:$0xff]
    %v936 = vld [vmem:[%s1 + $0xcf0] sm:$0xff]
    %v937 = vld [vmem:[%s1 + $0xd50] sm:$0xff]
    %v938 = vld [vmem:[%s1 + $0xdb0] sm:$0xff]
    %v939 = vld [vmem:[%s1 + $0xe10] sm:$0xf]
    %v941 = vsel %vm90, %v939, 0
    %943 = vmatpush.msra.mxu0 %v917
    %944 = vmatpush.msra.mxu0 %v916
    %945 = vmatpush.msra.mxu0 %v915
    %946 = vmatpush.msra.mxu0 %v914
    %947 = vmatpush.msra.mxu0 %v913
    %948 = vmatpush.msra.mxu0 %v912
    %949 = vmatpush.msra.mxu0 %v911
    %950 = vmatpush.msra.mxu0 %v910
    %951 = vmatpush.msra.mxu0 %v909
    %952 = vmatpush.msra.mxu0 %v908
    %953 = vmatpush.msra.mxu0 %v907
    %954 = vmatpush.msra.mxu0 %v906
    %955 = vmatpush.msra.mxu0 %v905
    %956 = vmatpush.msra.mxu0 %v904
    %957 = vmatpush.msra.mxu0 %v903
    %958 = vmatpush.msra.mxu0 %v902
    %959 = vmatmul.f32.gmra.mxu0 %v27
    %v960 = vpop.f32.mrf.mxu0
    %v961 = vadd.f32 0.0, %v960
    %962 = vmatmul.f32.gmra.mxu0 %v30
    %v963 = vpop.f32.mrf.mxu0
    %v964 = vadd.f32 0.0, %v963
    %965 = vmatmul.f32.gmra.mxu0 %v33
    %v966 = vpop.f32.mrf.mxu0
    %v967 = vadd.f32 0.0, %v966
    %968 = vmatmul.f32.gmra.mxu0 %v36
    %v969 = vpop.f32.mrf.mxu0
    %v970 = vadd.f32 0.0, %v969
    %971 = vdwg.mxu0
    %972 = vmatpush.msra.mxu0 %v933
    %973 = vmatpush.msra.mxu0 %v932
    %974 = vmatpush.msra.mxu0 %v931
    %975 = vmatpush.msra.mxu0 %v930
    %976 = vmatpush.msra.mxu0 %v929
    %977 = vmatpush.msra.mxu0 %v928
    %978 = vmatpush.msra.mxu0 %v927
    %979 = vmatpush.msra.mxu0 %v926
    %980 = vmatpush.msra.mxu0 %v925
    %981 = vmatpush.msra.mxu0 %v924
    %982 = vmatpush.msra.mxu0 %v923
    %983 = vmatpush.msra.mxu0 %v922
    %984 = vmatpush.msra.mxu0 %v921
    %985 = vmatpush.msra.mxu0 %v920
    %986 = vmatpush.msra.mxu0 %v919
    %987 = vmatpush.msra.mxu0 %v918
    %988 = vmatmul.f32.gmra.mxu0 %v28
    %v989 = vpop.f32.mrf.mxu0
    %v990 = vadd.f32 %v961, %v989
    %991 = vmatmul.f32.gmra.mxu0 %v31
    %v992 = vpop.f32.mrf.mxu0
    %v993 = vadd.f32 %v964, %v992
    %994 = vmatmul.f32.gmra.mxu0 %v34
    %v995 = vpop.f32.mrf.mxu0
    %v996 = vadd.f32 %v967, %v995
    %997 = vmatmul.f32.gmra.mxu0 %v37
    %v998 = vpop.f32.mrf.mxu0
    %v999 = vadd.f32 %v970, %v998
    %1000 = vdwg.mxu0
    %1001 = vmatpush.msra.mxu0 0.0
    %1002 = vmatpush.msra.mxu0 0.0
    %1003 = vmatpush.msra.mxu0 0.0
    %1004 = vmatpush.msra.mxu0 0.0
    %1005 = vmatpush.msra.mxu0 0.0
    %1006 = vmatpush.msra.mxu0 0.0
    %1007 = vmatpush.msra.mxu0 0.0
    %1008 = vmatpush.msra.mxu0 0.0
    %1009 = vmatpush.msra.mxu0 0.0
    %1010 = vmatpush.msra.mxu0 0.0
    %1011 = vmatpush.msra.mxu0 %v941
    %1012 = vmatpush.msra.mxu0 %v938
    %1013 = vmatpush.msra.mxu0 %v937
    %1014 = vmatpush.msra.mxu0 %v936
    %1015 = vmatpush.msra.mxu0 %v935
    %1016 = vmatpush.msra.mxu0 %v934
    %1017 = vmatmul.f32.gmra.mxu0 %v79
    %v1018 = vpop.f32.mrf.mxu0
    %v1019 = vadd.f32 %v990, %v1018
    %1020 = vmatmul.f32.gmra.mxu0 %v82
    %v1021 = vpop.f32.mrf.mxu0
    %v1022 = vadd.f32 %v993, %v1021
    %1023 = vmatmul.f32.gmra.mxu0 %v85
    %v1024 = vpop.f32.mrf.mxu0
    %v1025 = vadd.f32 %v996, %v1024
    %1026 = vmatmul.f32.gmra.mxu0 %v88
    %v1027 = vpop.f32.mrf.mxu0
    %v1028 = vadd.f32 %v999, %v1027
    %1029 = vdwg.mxu0
    %1030 = vst [vmem:[#allocation2] sm:$0xff] %v1019
    %1031 = vst [vmem:[#allocation2 + $0x8] sm:$0xff] %v1022
    %1032 = vst [vmem:[#allocation2 + $0x10] sm:$0xff] %v1025
    %1033 = vst [vmem:[#allocation2 + $0x18] sm:$0xff] %v1028
    %v1034 = vld [vmem:[#allocation2 + $0x3] sm:$0xff]
    %v1035 = vld [vmem:[#allocation2 + $0xb] sm:$0x1f]
    %v1036 = vld [vmem:[#allocation2 + $0x13] sm:$0xff]
    %v1037 = vld [vmem:[#allocation2 + $0x1b] sm:$0x1f]
    %v1038 = vadd.f32 %v898, %v1034
    %v1039 = vadd.f32 %v899, %v1035
    %v1040 = vadd.f32 %v900, %v1036
    %v1041 = vadd.f32 %v901, %v1037
    %vm1042 = vcmask 1044480
    %v1043 = vsel %vm1042, %v1039, -inf
    %v1044 = vmax.f32 %v1038, %v1043
    %v1045 = vrot.slane %v1044, 4
    %v1046 = vmax.f32 %v1044, %v1045
    %v1047 = vrot.slane %v1046, 2
    %v1048 = vmax.f32 %v1046, %v1047
    %v1049 = vrot.slane %v1048, 1
    %v1050 = vmax.f32 %v1048, %v1049
    %v1051 = vsel %vm1042, %v1041, -inf
    %v1052 = vmax.f32 %v1040, %v1051
    %v1053 = vrot.slane %v1052, 4
    %v1054 = vmax.f32 %v1052, %v1053
    %v1055 = vrot.slane %v1054, 2
    %v1056 = vmax.f32 %v1054, %v1055
    %v1057 = vrot.slane %v1056, 1
    %v1058 = vmax.f32 %v1056, %v1057
    %v1059 = vld [vmem:[%s1 + $0x38] sm:$0xff]
    %v1060 = vld [vmem:[%s1 + $0x98] sm:$0xff]
    %v1061 = vld [vmem:[%s1 + $0xf8] sm:$0xff]
    %v1062 = vld [vmem:[%s1 + $0x158] sm:$0xff]
    %v1063 = vld [vmem:[%s1 + $0x1b8] sm:$0xff]
    %v1064 = vld [vmem:[%s1 + $0x218] sm:$0xff]
    %v1065 = vld [vmem:[%s1 + $0x278] sm:$0xff]
    %v1066 = vld [vmem:[%s1 + $0x2d8] sm:$0xff]
    %v1067 = vld [vmem:[%s1 + $0x338] sm:$0xff]
    %v1068 = vld [vmem:[%s1 + $0x398] sm:$0xff]
    %v1069 = vld [vmem:[%s1 + $0x3f8] sm:$0xff]
    %v1070 = vld [vmem:[%s1 + $0x458] sm:$0xff]
    %v1071 = vld [vmem:[%s1 + $0x4b8] sm:$0xff]
    %v1072 = vld [vmem:[%s1 + $0x518] sm:$0xff]
    %v1073 = vld [vmem:[%s1 + $0x578] sm:$0xff]
    %v1074 = vld [vmem:[%s1 + $0x5d8] sm:$0xff]
    %v1075 = vld [vmem:[%s1 + $0x638] sm:$0xff]
    %v1076 = vld [vmem:[%s1 + $0x698] sm:$0xff]
    %v1077 = vld [vmem:[%s1 + $0x6f8] sm:$0xff]
    %v1078 = vld [vmem:[%s1 + $0x758] sm:$0xff]
    %v1079 = vld [vmem:[%s1 + $0x7b8] sm:$0xff]
    %v1080 = vld [vmem:[%s1 + $0x818] sm:$0xff]
    %v1081 = vld [vmem:[%s1 + $0x878] sm:$0xff]
    %v1082 = vld [vmem:[%s1 + $0x8d8] sm:$0xff]
    %v1083 = vld [vmem:[%s1 + $0x938] sm:$0xff]
    %v1084 = vld [vmem:[%s1 + $0x998] sm:$0xff]
    %v1085 = vld [vmem:[%s1 + $0x9f8] sm:$0xff]
    %v1086 = vld [vmem:[%s1 + $0xa58] sm:$0xff]
    %v1087 = vld [vmem:[%s1 + $0xab8] sm:$0xff]
    %v1088 = vld [vmem:[%s1 + $0xb18] sm:$0xff]
    %v1089 = vld [vmem:[%s1 + $0xb78] sm:$0xff]
    %v1090 = vld [vmem:[%s1 + $0xbd8] sm:$0xff]
    %v1091 = vld [vmem:[%s1 + $0xc38] sm:$0xff]
    %v1092 = vld [vmem:[%s1 + $0xc98] sm:$0xff]
    %v1093 = vld [vmem:[%s1 + $0xcf8] sm:$0xff]
    %v1094 = vld [vmem:[%s1 + $0xd58] sm:$0xff]
    %v1095 = vld [vmem:[%s1 + $0xdb8] sm:$0xff]
    %v1096 = vld [vmem:[%s1 + $0xe18] sm:$0xf]
    %v1098 = vsel %vm90, %v1096, 0
    %1100 = vmatpush.msra.mxu0 %v1074
    %1101 = vmatpush.msra.mxu0 %v1073
    %1102 = vmatpush.msra.mxu0 %v1072
    %1103 = vmatpush.msra.mxu0 %v1071
    %1104 = vmatpush.msra.mxu0 %v1070
    %1105 = vmatpush.msra.mxu0 %v1069
    %1106 = vmatpush.msra.mxu0 %v1068
    %1107 = vmatpush.msra.mxu0 %v1067
    %1108 = vmatpush.msra.mxu0 %v1066
    %1109 = vmatpush.msra.mxu0 %v1065
    %1110 = vmatpush.msra.mxu0 %v1064
    %1111 = vmatpush.msra.mxu0 %v1063
    %1112 = vmatpush.msra.mxu0 %v1062
    %1113 = vmatpush.msra.mxu0 %v1061
    %1114 = vmatpush.msra.mxu0 %v1060
    %1115 = vmatpush.msra.mxu0 %v1059
    %1116 = vmatmul.f32.gmra.mxu0 %v27
    %v1117 = vpop.f32.mrf.mxu0
    %v1118 = vadd.f32 0.0, %v1117
    %1119 = vmatmul.f32.gmra.mxu0 %v30
    %v1120 = vpop.f32.mrf.mxu0
    %v1121 = vadd.f32 0.0, %v1120
    %1122 = vmatmul.f32.gmra.mxu0 %v33
    %v1123 = vpop.f32.mrf.mxu0
    %v1124 = vadd.f32 0.0, %v1123
    %1125 = vmatmul.f32.gmra.mxu0 %v36
    %v1126 = vpop.f32.mrf.mxu0
    %v1127 = vadd.f32 0.0, %v1126
    %1128 = vdwg.mxu0
    %1129 = vmatpush.msra.mxu0 %v1090
    %1130 = vmatpush.msra.mxu0 %v1089
    %1131 = vmatpush.msra.mxu0 %v1088
    %1132 = vmatpush.msra.mxu0 %v1087
    %1133 = vmatpush.msra.mxu0 %v1086
    %1134 = vmatpush.msra.mxu0 %v1085
    %1135 = vmatpush.msra.mxu0 %v1084
    %1136 = vmatpush.msra.mxu0 %v1083
    %1137 = vmatpush.msra.mxu0 %v1082
    %1138 = vmatpush.msra.mxu0 %v1081
    %1139 = vmatpush.msra.mxu0 %v1080
    %1140 = vmatpush.msra.mxu0 %v1079
    %1141 = vmatpush.msra.mxu0 %v1078
    %1142 = vmatpush.msra.mxu0 %v1077
    %1143 = vmatpush.msra.mxu0 %v1076
    %1144 = vmatpush.msra.mxu0 %v1075
    %1145 = vmatmul.f32.gmra.mxu0 %v28
    %v1146 = vpop.f32.mrf.mxu0
    %v1147 = vadd.f32 %v1118, %v1146
    %1148 = vmatmul.f32.gmra.mxu0 %v31
    %v1149 = vpop.f32.mrf.mxu0
    %v1150 = vadd.f32 %v1121, %v1149
    %1151 = vmatmul.f32.gmra.mxu0 %v34
    %v1152 = vpop.f32.mrf.mxu0
    %v1153 = vadd.f32 %v1124, %v1152
    %1154 = vmatmul.f32.gmra.mxu0 %v37
    %v1155 = vpop.f32.mrf.mxu0
    %v1156 = vadd.f32 %v1127, %v1155
    %1157 = vdwg.mxu0
    %1158 = vmatpush.msra.mxu0 0.0
    %1159 = vmatpush.msra.mxu0 0.0
    %1160 = vmatpush.msra.mxu0 0.0
    %1161 = vmatpush.msra.mxu0 0.0
    %1162 = vmatpush.msra.mxu0 0.0
    %1163 = vmatpush.msra.mxu0 0.0
    %1164 = vmatpush.msra.mxu0 0.0
    %1165 = vmatpush.msra.mxu0 0.0
    %1166 = vmatpush.msra.mxu0 0.0
    %1167 = vmatpush.msra.mxu0 0.0
    %1168 = vmatpush.msra.mxu0 %v1098
    %1169 = vmatpush.msra.mxu0 %v1095
    %1170 = vmatpush.msra.mxu0 %v1094
    %1171 = vmatpush.msra.mxu0 %v1093
    %1172 = vmatpush.msra.mxu0 %v1092
    %1173 = vmatpush.msra.mxu0 %v1091
    %1174 = vmatmul.f32.gmra.mxu0 %v79
    %v1175 = vpop.f32.mrf.mxu0
    %v1176 = vadd.f32 %v1147, %v1175
    %1177 = vmatmul.f32.gmra.mxu0 %v82
    %v1178 = vpop.f32.mrf.mxu0
    %v1179 = vadd.f32 %v1150, %v1178
    %1180 = vmatmul.f32.gmra.mxu0 %v85
    %v1181 = vpop.f32.mrf.mxu0
    %v1182 = vadd.f32 %v1153, %v1181
    %1183 = vmatmul.f32.gmra.mxu0 %v88
    %v1184 = vpop.f32.mrf.mxu0
    %v1185 = vadd.f32 %v1156, %v1184
    %1186 = vdwg.mxu0
    %1187 = vst [vmem:[#allocation2] sm:$0xff] %v1176
    %1188 = vst [vmem:[#allocation2 + $0x8] sm:$0xff] %v1179
    %1189 = vst [vmem:[#allocation2 + $0x10] sm:$0xff] %v1182
    %1190 = vst [vmem:[#allocation2 + $0x18] sm:$0xff] %v1185
    %v1191 = vld [vmem:[#allocation2] sm:$0xff]
    %v1192 = vld [vmem:[#allocation2 + $0x8] sm:$0xf]
    %v1193 = vld [vmem:[#allocation2 + $0x10] sm:$0xff]
    %v1194 = vld [vmem:[#allocation2 + $0x18] sm:$0xf]
    %v1195 = vld [vmem:[%s1 + $0x40] sm:$0xff]
    %v1196 = vld [vmem:[%s1 + $0xa0] sm:$0xff]
    %v1197 = vld [vmem:[%s1 + $0x100] sm:$0xff]
    %v1198 = vld [vmem:[%s1 + $0x160] sm:$0xff]
    %v1199 = vld [vmem:[%s1 + $0x1c0] sm:$0xff]
    %v1200 = vld [vmem:[%s1 + $0x220] sm:$0xff]
    %v1201 = vld [vmem:[%s1 + $0x280] sm:$0xff]
    %v1202 = vld [vmem:[%s1 + $0x2e0] sm:$0xff]
    %v1203 = vld [vmem:[%s1 + $0x340] sm:$0xff]
    %v1204 = vld [vmem:[%s1 + $0x3a0] sm:$0xff]
    %v1205 = vld [vmem:[%s1 + $0x400] sm:$0xff]
    %v1206 = vld [vmem:[%s1 + $0x460] sm:$0xff]
    %v1207 = vld [vmem:[%s1 + $0x4c0] sm:$0xff]
    %v1208 = vld [vmem:[%s1 + $0x520] sm:$0xff]
    %v1209 = vld [vmem:[%s1 + $0x580] sm:$0xff]
    %v1210 = vld [vmem:[%s1 + $0x5e0] sm:$0xff]
    %v1211 = vld [vmem:[%s1 + $0x640] sm:$0xff]
    %v1212 = vld [vmem:[%s1 + $0x6a0] sm:$0xff]
    %v1213 = vld [vmem:[%s1 + $0x700] sm:$0xff]
    %v1214 = vld [vmem:[%s1 + $0x760] sm:$0xff]
    %v1215 = vld [vmem:[%s1 + $0x7c0] sm:$0xff]
    %v1216 = vld [vmem:[%s1 + $0x820] sm:$0xff]
    %v1217 = vld [vmem:[%s1 + $0x880] sm:$0xff]
    %v1218 = vld [vmem:[%s1 + $0x8e0] sm:$0xff]
    %v1219 = vld [vmem:[%s1 + $0x940] sm:$0xff]
    %v1220 = vld [vmem:[%s1 + $0x9a0] sm:$0xff]
    %v1221 = vld [vmem:[%s1 + $0xa00] sm:$0xff]
    %v1222 = vld [vmem:[%s1 + $0xa60] sm:$0xff]
    %v1223 = vld [vmem:[%s1 + $0xac0] sm:$0xff]
    %v1224 = vld [vmem:[%s1 + $0xb20] sm:$0xff]
    %v1225 = vld [vmem:[%s1 + $0xb80] sm:$0xff]
    %v1226 = vld [vmem:[%s1 + $0xbe0] sm:$0xff]
    %v1227 = vld [vmem:[%s1 + $0xc40] sm:$0xff]
    %v1228 = vld [vmem:[%s1 + $0xca0] sm:$0xff]
    %v1229 = vld [vmem:[%s1 + $0xd00] sm:$0xff]
    %v1230 = vld [vmem:[%s1 + $0xd60] sm:$0xff]
    %v1231 = vld [vmem:[%s1 + $0xdc0] sm:$0xff]
    %v1232 = vld [vmem:[%s1 + $0xe20] sm:$0xf]
    %v1234 = vsel %vm90, %v1232, 0
    %1236 = vmatpush.msra.mxu0 %v1210
    %1237 = vmatpush.msra.mxu0 %v1209
    %1238 = vmatpush.msra.mxu0 %v1208
    %1239 = vmatpush.msra.mxu0 %v1207
    %1240 = vmatpush.msra.mxu0 %v1206
    %1241 = vmatpush.msra.mxu0 %v1205
    %1242 = vmatpush.msra.mxu0 %v1204
    %1243 = vmatpush.msra.mxu0 %v1203
    %1244 = vmatpush.msra.mxu0 %v1202
    %1245 = vmatpush.msra.mxu0 %v1201
    %1246 = vmatpush.msra.mxu0 %v1200
    %1247 = vmatpush.msra.mxu0 %v1199
    %1248 = vmatpush.msra.mxu0 %v1198
    %1249 = vmatpush.msra.mxu0 %v1197
    %1250 = vmatpush.msra.mxu0 %v1196
    %1251 = vmatpush.msra.mxu0 %v1195
    %1252 = vmatmul.f32.gmra.mxu0 %v27
    %v1253 = vpop.f32.mrf.mxu0
    %v1254 = vadd.f32 0.0, %v1253
    %1255 = vmatmul.f32.gmra.mxu0 %v30
    %v1256 = vpop.f32.mrf.mxu0
    %v1257 = vadd.f32 0.0, %v1256
    %1258 = vmatmul.f32.gmra.mxu0 %v33
    %v1259 = vpop.f32.mrf.mxu0
    %v1260 = vadd.f32 0.0, %v1259
    %1261 = vmatmul.f32.gmra.mxu0 %v36
    %v1262 = vpop.f32.mrf.mxu0
    %v1263 = vadd.f32 0.0, %v1262
    %1264 = vdwg.mxu0
    %1265 = vmatpush.msra.mxu0 %v1226
    %1266 = vmatpush.msra.mxu0 %v1225
    %1267 = vmatpush.msra.mxu0 %v1224
    %1268 = vmatpush.msra.mxu0 %v1223
    %1269 = vmatpush.msra.mxu0 %v1222
    %1270 = vmatpush.msra.mxu0 %v1221
    %1271 = vmatpush.msra.mxu0 %v1220
    %1272 = vmatpush.msra.mxu0 %v1219
    %1273 = vmatpush.msra.mxu0 %v1218
    %1274 = vmatpush.msra.mxu0 %v1217
    %1275 = vmatpush.msra.mxu0 %v1216
    %1276 = vmatpush.msra.mxu0 %v1215
    %1277 = vmatpush.msra.mxu0 %v1214
    %1278 = vmatpush.msra.mxu0 %v1213
    %1279 = vmatpush.msra.mxu0 %v1212
    %1280 = vmatpush.msra.mxu0 %v1211
    %1281 = vmatmul.f32.gmra.mxu0 %v28
    %v1282 = vpop.f32.mrf.mxu0
    %v1283 = vadd.f32 %v1254, %v1282
    %1284 = vmatmul.f32.gmra.mxu0 %v31
    %v1285 = vpop.f32.mrf.mxu0
    %v1286 = vadd.f32 %v1257, %v1285
    %1287 = vmatmul.f32.gmra.mxu0 %v34
    %v1288 = vpop.f32.mrf.mxu0
    %v1289 = vadd.f32 %v1260, %v1288
    %1290 = vmatmul.f32.gmra.mxu0 %v37
    %v1291 = vpop.f32.mrf.mxu0
    %v1292 = vadd.f32 %v1263, %v1291
    %1293 = vdwg.mxu0
    %1294 = vmatpush.msra.mxu0 0.0
    %1295 = vmatpush.msra.mxu0 0.0
    %1296 = vmatpush.msra.mxu0 0.0
    %1297 = vmatpush.msra.mxu0 0.0
    %1298 = vmatpush.msra.mxu0 0.0
    %1299 = vmatpush.msra.mxu0 0.0
    %1300 = vmatpush.msra.mxu0 0.0
    %1301 = vmatpush.msra.mxu0 0.0
    %1302 = vmatpush.msra.mxu0 0.0
    %1303 = vmatpush.msra.mxu0 0.0
    %1304 = vmatpush.msra.mxu0 %v1234
    %1305 = vmatpush.msra.mxu0 %v1231
    %1306 = vmatpush.msra.mxu0 %v1230
    %1307 = vmatpush.msra.mxu0 %v1229
    %1308 = vmatpush.msra.mxu0 %v1228
    %1309 = vmatpush.msra.mxu0 %v1227
    %1310 = vmatmul.f32.gmra.mxu0 %v79
    %v1311 = vpop.f32.mrf.mxu0
    %v1312 = vadd.f32 %v1283, %v1311
    %1313 = vmatmul.f32.gmra.mxu0 %v82
    %v1314 = vpop.f32.mrf.mxu0
    %v1315 = vadd.f32 %v1286, %v1314
    %1316 = vmatmul.f32.gmra.mxu0 %v85
    %v1317 = vpop.f32.mrf.mxu0
    %v1318 = vadd.f32 %v1289, %v1317
    %1319 = vmatmul.f32.gmra.mxu0 %v88
    %v1320 = vpop.f32.mrf.mxu0
    %v1321 = vadd.f32 %v1292, %v1320
    %1322 = vdwg.mxu0
    %1323 = vst [vmem:[#allocation2] sm:$0xff] %v1312
    %1324 = vst [vmem:[#allocation2 + $0x8] sm:$0xff] %v1315
    %1325 = vst [vmem:[#allocation2 + $0x10] sm:$0xff] %v1318
    %1326 = vst [vmem:[#allocation2 + $0x18] sm:$0xff] %v1321
    %v1327 = vld [vmem:[#allocation2 + $0x1] sm:$0xff]
    %v1328 = vld [vmem:[#allocation2 + $0x9] sm:$0xf]
    %v1329 = vld [vmem:[#allocation2 + $0x11] sm:$0xff]
    %v1330 = vld [vmem:[#allocation2 + $0x19] sm:$0xf]
    %v1331 = vadd.f32 %v1191, %v1327
    %v1332 = vadd.f32 %v1192, %v1328
    %v1333 = vadd.f32 %v1193, %v1329
    %v1334 = vadd.f32 %v1194, %v1330
    %v1335 = vld [vmem:[%s1 + $0x48] sm:$0xff]
    %v1336 = vld [vmem:[%s1 + $0xa8] sm:$0xff]
    %v1337 = vld [vmem:[%s1 + $0x108] sm:$0xff]
    %v1338 = vld [vmem:[%s1 + $0x168] sm:$0xff]
    %v1339 = vld [vmem:[%s1 + $0x1c8] sm:$0xff]
    %v1340 = vld [vmem:[%s1 + $0x228] sm:$0xff]
    %v1341 = vld [vmem:[%s1 + $0x288] sm:$0xff]
    %v1342 = vld [vmem:[%s1 + $0x2e8] sm:$0xff]
    %v1343 = vld [vmem:[%s1 + $0x348] sm:$0xff]
    %v1344 = vld [vmem:[%s1 + $0x3a8] sm:$0xff]
    %v1345 = vld [vmem:[%s1 + $0x408] sm:$0xff]
    %v1346 = vld [vmem:[%s1 + $0x468] sm:$0xff]
    %v1347 = vld [vmem:[%s1 + $0x4c8] sm:$0xff]
    %v1348 = vld [vmem:[%s1 + $0x528] sm:$0xff]
    %v1349 = vld [vmem:[%s1 + $0x588] sm:$0xff]
    %v1350 = vld [vmem:[%s1 + $0x5e8] sm:$0xff]
    %v1351 = vld [vmem:[%s1 + $0x648] sm:$0xff]
    %v1352 = vld [vmem:[%s1 + $0x6a8] sm:$0xff]
    %v1353 = vld [vmem:[%s1 + $0x708] sm:$0xff]
    %v1354 = vld [vmem:[%s1 + $0x768] sm:$0xff]
    %v1355 = vld [vmem:[%s1 + $0x7c8] sm:$0xff]
    %v1356 = vld [vmem:[%s1 + $0x828] sm:$0xff]
    %v1357 = vld [vmem:[%s1 + $0x888] sm:$0xff]
    %v1358 = vld [vmem:[%s1 + $0x8e8] sm:$0xff]
    %v1359 = vld [vmem:[%s1 + $0x948] sm:$0xff]
    %v1360 = vld [vmem:[%s1 + $0x9a8] sm:$0xff]
    %v1361 = vld [vmem:[%s1 + $0xa08] sm:$0xff]
    %v1362 = vld [vmem:[%s1 + $0xa68] sm:$0xff]
    %v1363 = vld [vmem:[%s1 + $0xac8] sm:$0xff]
    %v1364 = vld [vmem:[%s1 + $0xb28] sm:$0xff]
    %v1365 = vld [vmem:[%s1 + $0xb88] sm:$0xff]
    %v1366 = vld [vmem:[%s1 + $0xbe8] sm:$0xff]
    %v1367 = vld [vmem:[%s1 + $0xc48] sm:$0xff]
    %v1368 = vld [vmem:[%s1 + $0xca8] sm:$0xff]
    %v1369 = vld [vmem:[%s1 + $0xd08] sm:$0xff]
    %v1370 = vld [vmem:[%s1 + $0xd68] sm:$0xff]
    %v1371 = vld [vmem:[%s1 + $0xdc8] sm:$0xff]
    %v1372 = vld [vmem:[%s1 + $0xe28] sm:$0xf]
    %v1374 = vsel %vm90, %v1372, 0
    %1376 = vmatpush.msra.mxu0 %v1350
    %1377 = vmatpush.msra.mxu0 %v1349
    %1378 = vmatpush.msra.mxu0 %v1348
    %1379 = vmatpush.msra.mxu0 %v1347
    %1380 = vmatpush.msra.mxu0 %v1346
    %1381 = vmatpush.msra.mxu0 %v1345
    %1382 = vmatpush.msra.mxu0 %v1344
    %1383 = vmatpush.msra.mxu0 %v1343
    %1384 = vmatpush.msra.mxu0 %v1342
    %1385 = vmatpush.msra.mxu0 %v1341
    %1386 = vmatpush.msra.mxu0 %v1340
    %1387 = vmatpush.msra.mxu0 %v1339
    %1388 = vmatpush.msra.mxu0 %v1338
    %1389 = vmatpush.msra.mxu0 %v1337
    %1390 = vmatpush.msra.mxu0 %v1336
    %1391 = vmatpush.msra.mxu0 %v1335
    %1392 = vmatmul.f32.gmra.mxu0 %v27
    %v1393 = vpop.f32.mrf.mxu0
    %v1394 = vadd.f32 0.0, %v1393
    %1395 = vmatmul.f32.gmra.mxu0 %v30
    %v1396 = vpop.f32.mrf.mxu0
    %v1397 = vadd.f32 0.0, %v1396
    %1398 = vmatmul.f32.gmra.mxu0 %v33
    %v1399 = vpop.f32.mrf.mxu0
    %v1400 = vadd.f32 0.0, %v1399
    %1401 = vmatmul.f32.gmra.mxu0 %v36
    %v1402 = vpop.f32.mrf.mxu0
    %v1403 = vadd.f32 0.0, %v1402
    %1404 = vdwg.mxu0
    %1405 = vmatpush.msra.mxu0 %v1366
    %1406 = vmatpush.msra.mxu0 %v1365
    %1407 = vmatpush.msra.mxu0 %v1364
    %1408 = vmatpush.msra.mxu0 %v1363
    %1409 = vmatpush.msra.mxu0 %v1362
    %1410 = vmatpush.msra.mxu0 %v1361
    %1411 = vmatpush.msra.mxu0 %v1360
    %1412 = vmatpush.msra.mxu0 %v1359
    %1413 = vmatpush.msra.mxu0 %v1358
    %1414 = vmatpush.msra.mxu0 %v1357
    %1415 = vmatpush.msra.mxu0 %v1356
    %1416 = vmatpush.msra.mxu0 %v1355
    %1417 = vmatpush.msra.mxu0 %v1354
    %1418 = vmatpush.msra.mxu0 %v1353
    %1419 = vmatpush.msra.mxu0 %v1352
    %1420 = vmatpush.msra.mxu0 %v1351
    %1421 = vmatmul.f32.gmra.mxu0 %v28
    %v1422 = vpop.f32.mrf.mxu0
    %v1423 = vadd.f32 %v1394, %v1422
    %1424 = vmatmul.f32.gmra.mxu0 %v31
    %v1425 = vpop.f32.mrf.mxu0
    %v1426 = vadd.f32 %v1397, %v1425
    %1427 = vmatmul.f32.gmra.mxu0 %v34
    %v1428 = vpop.f32.mrf.mxu0
    %v1429 = vadd.f32 %v1400, %v1428
    %1430 = vmatmul.f32.gmra.mxu0 %v37
    %v1431 = vpop.f32.mrf.mxu0
    %v1432 = vadd.f32 %v1403, %v1431
    %1433 = vdwg.mxu0
    %1434 = vmatpush.msra.mxu0 0.0
    %1435 = vmatpush.msra.mxu0 0.0
    %1436 = vmatpush.msra.mxu0 0.0
    %1437 = vmatpush.msra.mxu0 0.0
    %1438 = vmatpush.msra.mxu0 0.0
    %1439 = vmatpush.msra.mxu0 0.0
    %1440 = vmatpush.msra.mxu0 0.0
    %1441 = vmatpush.msra.mxu0 0.0
    %1442 = vmatpush.msra.mxu0 0.0
    %1443 = vmatpush.msra.mxu0 0.0
    %1444 = vmatpush.msra.mxu0 %v1374
    %1445 = vmatpush.msra.mxu0 %v1371
    %1446 = vmatpush.msra.mxu0 %v1370
    %1447 = vmatpush.msra.mxu0 %v1369
    %1448 = vmatpush.msra.mxu0 %v1368
    %1449 = vmatpush.msra.mxu0 %v1367
    %1450 = vmatmul.f32.gmra.mxu0 %v79
    %v1451 = vpop.f32.mrf.mxu0
    %v1452 = vadd.f32 %v1423, %v1451
    %1453 = vmatmul.f32.gmra.mxu0 %v82
    %v1454 = vpop.f32.mrf.mxu0
    %v1455 = vadd.f32 %v1426, %v1454
    %1456 = vmatmul.f32.gmra.mxu0 %v85
    %v1457 = vpop.f32.mrf.mxu0
    %v1458 = vadd.f32 %v1429, %v1457
    %1459 = vmatmul.f32.gmra.mxu0 %v88
    %v1460 = vpop.f32.mrf.mxu0
    %v1461 = vadd.f32 %v1432, %v1460
    %1462 = vdwg.mxu0
    %1463 = vst [vmem:[#allocation2] sm:$0xff] %v1452
    %1464 = vst [vmem:[#allocation2 + $0x8] sm:$0xff] %v1455
    %1465 = vst [vmem:[#allocation2 + $0x10] sm:$0xff] %v1458
    %1466 = vst [vmem:[#allocation2 + $0x18] sm:$0xff] %v1461
    %v1467 = vld [vmem:[#allocation2 + $0x2] sm:$0xff]
    %v1468 = vld [vmem:[#allocation2 + $0xa] sm:$0xf]
    %v1469 = vld [vmem:[#allocation2 + $0x12] sm:$0xff]
    %v1470 = vld [vmem:[#allocation2 + $0x1a] sm:$0xf]
    %v1471 = vadd.f32 %v1331, %v1467
    %v1472 = vadd.f32 %v1332, %v1468
    %v1473 = vadd.f32 %v1333, %v1469
    %v1474 = vadd.f32 %v1334, %v1470
    %v1475 = vld [vmem:[%s1 + $0x50] sm:$0xff]
    %v1476 = vld [vmem:[%s1 + $0xb0] sm:$0xff]
    %v1477 = vld [vmem:[%s1 + $0x110] sm:$0xff]
    %v1478 = vld [vmem:[%s1 + $0x170] sm:$0xff]
    %v1479 = vld [vmem:[%s1 + $0x1d0] sm:$0xff]
    %v1480 = vld [vmem:[%s1 + $0x230] sm:$0xff]
    %v1481 = vld [vmem:[%s1 + $0x290] sm:$0xff]
    %v1482 = vld [vmem:[%s1 + $0x2f0] sm:$0xff]
    %v1483 = vld [vmem:[%s1 + $0x350] sm:$0xff]
    %v1484 = vld [vmem:[%s1 + $0x3b0] sm:$0xff]
    %v1485 = vld [vmem:[%s1 + $0x410] sm:$0xff]
    %v1486 = vld [vmem:[%s1 + $0x470] sm:$0xff]
    %v1487 = vld [vmem:[%s1 + $0x4d0] sm:$0xff]
    %v1488 = vld [vmem:[%s1 + $0x530] sm:$0xff]
    %v1489 = vld [vmem:[%s1 + $0x590] sm:$0xff]
    %v1490 = vld [vmem:[%s1 + $0x5f0] sm:$0xff]
    %v1491 = vld [vmem:[%s1 + $0x650] sm:$0xff]
    %v1492 = vld [vmem:[%s1 + $0x6b0] sm:$0xff]
    %v1493 = vld [vmem:[%s1 + $0x710] sm:$0xff]
    %v1494 = vld [vmem:[%s1 + $0x770] sm:$0xff]
    %v1495 = vld [vmem:[%s1 + $0x7d0] sm:$0xff]
    %v1496 = vld [vmem:[%s1 + $0x830] sm:$0xff]
    %v1497 = vld [vmem:[%s1 + $0x890] sm:$0xff]
    %v1498 = vld [vmem:[%s1 + $0x8f0] sm:$0xff]
    %v1499 = vld [vmem:[%s1 + $0x950] sm:$0xff]
    %v1500 = vld [vmem:[%s1 + $0x9b0] sm:$0xff]
    %v1501 = vld [vmem:[%s1 + $0xa10] sm:$0xff]
    %v1502 = vld [vmem:[%s1 + $0xa70] sm:$0xff]
    %v1503 = vld [vmem:[%s1 + $0xad0] sm:$0xff]
    %v1504 = vld [vmem:[%s1 + $0xb30] sm:$0xff]
    %v1505 = vld [vmem:[%s1 + $0xb90] sm:$0xff]
    %v1506 = vld [vmem:[%s1 + $0xbf0] sm:$0xff]
    %v1507 = vld [vmem:[%s1 + $0xc50] sm:$0xff]
    %v1508 = vld [vmem:[%s1 + $0xcb0] sm:$0xff]
    %v1509 = vld [vmem:[%s1 + $0xd10] sm:$0xff]
    %v1510 = vld [vmem:[%s1 + $0xd70] sm:$0xff]
    %v1511 = vld [vmem:[%s1 + $0xdd0] sm:$0xff]
    %v1512 = vld [vmem:[%s1 + $0xe30] sm:$0xf]
    %v1514 = vsel %vm90, %v1512, 0
    %1516 = vmatpush.msra.mxu0 %v1490
    %1517 = vmatpush.msra.mxu0 %v1489
    %1518 = vmatpush.msra.mxu0 %v1488
    %1519 = vmatpush.msra.mxu0 %v1487
    %1520 = vmatpush.msra.mxu0 %v1486
    %1521 = vmatpush.msra.mxu0 %v1485
    %1522 = vmatpush.msra.mxu0 %v1484
    %1523 = vmatpush.msra.mxu0 %v1483
    %1524 = vmatpush.msra.mxu0 %v1482
    %1525 = vmatpush.msra.mxu0 %v1481
    %1526 = vmatpush.msra.mxu0 %v1480
    %1527 = vmatpush.msra.mxu0 %v1479
    %1528 = vmatpush.msra.mxu0 %v1478
    %1529 = vmatpush.msra.mxu0 %v1477
    %1530 = vmatpush.msra.mxu0 %v1476
    %1531 = vmatpush.msra.mxu0 %v1475
    %1532 = vmatmul.f32.gmra.mxu0 %v27
    %v1533 = vpop.f32.mrf.mxu0
    %v1534 = vadd.f32 0.0, %v1533
    %1535 = vmatmul.f32.gmra.mxu0 %v30
    %v1536 = vpop.f32.mrf.mxu0
    %v1537 = vadd.f32 0.0, %v1536
    %1538 = vmatmul.f32.gmra.mxu0 %v33
    %v1539 = vpop.f32.mrf.mxu0
    %v1540 = vadd.f32 0.0, %v1539
    %1541 = vmatmul.f32.gmra.mxu0 %v36
    %v1542 = vpop.f32.mrf.mxu0
    %v1543 = vadd.f32 0.0, %v1542
    %1544 = vdwg.mxu0
    %1545 = vmatpush.msra.mxu0 %v1506
    %1546 = vmatpush.msra.mxu0 %v1505
    %1547 = vmatpush.msra.mxu0 %v1504
    %1548 = vmatpush.msra.mxu0 %v1503
    %1549 = vmatpush.msra.mxu0 %v1502
    %1550 = vmatpush.msra.mxu0 %v1501
    %1551 = vmatpush.msra.mxu0 %v1500
    %1552 = vmatpush.msra.mxu0 %v1499
    %1553 = vmatpush.msra.mxu0 %v1498
    %1554 = vmatpush.msra.mxu0 %v1497
    %1555 = vmatpush.msra.mxu0 %v1496
    %1556 = vmatpush.msra.mxu0 %v1495
    %1557 = vmatpush.msra.mxu0 %v1494
    %1558 = vmatpush.msra.mxu0 %v1493
    %1559 = vmatpush.msra.mxu0 %v1492
    %1560 = vmatpush.msra.mxu0 %v1491
    %1561 = vmatmul.f32.gmra.mxu0 %v28
    %v1562 = vpop.f32.mrf.mxu0
    %v1563 = vadd.f32 %v1534, %v1562
    %1564 = vmatmul.f32.gmra.mxu0 %v31
    %v1565 = vpop.f32.mrf.mxu0
    %v1566 = vadd.f32 %v1537, %v1565
    %1567 = vmatmul.f32.gmra.mxu0 %v34
    %v1568 = vpop.f32.mrf.mxu0
    %v1569 = vadd.f32 %v1540, %v1568
    %1570 = vmatmul.f32.gmra.mxu0 %v37
    %v1571 = vpop.f32.mrf.mxu0
    %v1572 = vadd.f32 %v1543, %v1571
    %1573 = vdwg.mxu0
    %1574 = vmatpush.msra.mxu0 0.0
    %1575 = vmatpush.msra.mxu0 0.0
    %1576 = vmatpush.msra.mxu0 0.0
    %1577 = vmatpush.msra.mxu0 0.0
    %1578 = vmatpush.msra.mxu0 0.0
    %1579 = vmatpush.msra.mxu0 0.0
    %1580 = vmatpush.msra.mxu0 0.0
    %1581 = vmatpush.msra.mxu0 0.0
    %1582 = vmatpush.msra.mxu0 0.0
    %1583 = vmatpush.msra.mxu0 0.0
    %1584 = vmatpush.msra.mxu0 %v1514
    %1585 = vmatpush.msra.mxu0 %v1511
    %1586 = vmatpush.msra.mxu0 %v1510
    %1587 = vmatpush.msra.mxu0 %v1509
    %1588 = vmatpush.msra.mxu0 %v1508
    %1589 = vmatpush.msra.mxu0 %v1507
    %1590 = vmatmul.f32.gmra.mxu0 %v79
    %v1591 = vpop.f32.mrf.mxu0
    %v1592 = vadd.f32 %v1563, %v1591
    %1593 = vmatmul.f32.gmra.mxu0 %v82
    %v1594 = vpop.f32.mrf.mxu0
    %v1595 = vadd.f32 %v1566, %v1594
    %1596 = vmatmul.f32.gmra.mxu0 %v85
    %v1597 = vpop.f32.mrf.mxu0
    %v1598 = vadd.f32 %v1569, %v1597
    %1599 = vmatmul.f32.gmra.mxu0 %v88
    %v1600 = vpop.f32.mrf.mxu0
    %v1601 = vadd.f32 %v1572, %v1600
    %1602 = vdwg.mxu0
    %1603 = vst [vmem:[#allocation2] sm:$0xff] %v1592
    %1604 = vst [vmem:[#allocation2 + $0x8] sm:$0xff] %v1595
    %1605 = vst [vmem:[#allocation2 + $0x10] sm:$0xff] %v1598
    %1606 = vst [vmem:[#allocation2 + $0x18] sm:$0xff] %v1601
    %v1607 = vld [vmem:[#allocation2 + $0x3] sm:$0xff]
    %v1608 = vld [vmem:[#allocation2 + $0xb] sm:$0xf]
    %v1609 = vld [vmem:[#allocation2 + $0x13] sm:$0xff]
    %v1610 = vld [vmem:[#allocation2 + $0x1b] sm:$0xf]
    %v1611 = vadd.f32 %v1471, %v1607
    %v1612 = vadd.f32 %v1472, %v1608
    %v1613 = vadd.f32 %v1473, %v1609
    %v1614 = vadd.f32 %v1474, %v1610
    %v1615 = vld [vmem:[%s1 + $0x58] sm:$0xff]
    %v1616 = vld [vmem:[%s1 + $0xb8] sm:$0xff]
    %v1617 = vld [vmem:[%s1 + $0x118] sm:$0xff]
    %v1618 = vld [vmem:[%s1 + $0x178] sm:$0xff]
    %v1619 = vld [vmem:[%s1 + $0x1d8] sm:$0xff]
    %v1620 = vld [vmem:[%s1 + $0x238] sm:$0xff]
    %v1621 = vld [vmem:[%s1 + $0x298] sm:$0xff]
    %v1622 = vld [vmem:[%s1 + $0x2f8] sm:$0xff]
    %v1623 = vld [vmem:[%s1 + $0x358] sm:$0xff]
    %v1624 = vld [vmem:[%s1 + $0x3b8] sm:$0xff]
    %v1625 = vld [vmem:[%s1 + $0x418] sm:$0xff]
    %v1626 = vld [vmem:[%s1 + $0x478] sm:$0xff]
    %v1627 = vld [vmem:[%s1 + $0x4d8] sm:$0xff]
    %v1628 = vld [vmem:[%s1 + $0x538] sm:$0xff]
    %v1629 = vld [vmem:[%s1 + $0x598] sm:$0xff]
    %v1630 = vld [vmem:[%s1 + $0x5f8] sm:$0xff]
    %v1631 = vld [vmem:[%s1 + $0x658] sm:$0xff]
    %v1632 = vld [vmem:[%s1 + $0x6b8] sm:$0xff]
    %v1633 = vld [vmem:[%s1 + $0x718] sm:$0xff]
    %v1634 = vld [vmem:[%s1 + $0x778] sm:$0xff]
    %v1635 = vld [vmem:[%s1 + $0x7d8] sm:$0xff]
    %v1636 = vld [vmem:[%s1 + $0x838] sm:$0xff]
    %v1637 = vld [vmem:[%s1 + $0x898] sm:$0xff]
    %v1638 = vld [vmem:[%s1 + $0x8f8] sm:$0xff]
    %v1639 = vld [vmem:[%s1 + $0x958] sm:$0xff]
    %v1640 = vld [vmem:[%s1 + $0x9b8] sm:$0xff]
    %v1641 = vld [vmem:[%s1 + $0xa18] sm:$0xff]
    %v1642 = vld [vmem:[%s1 + $0xa78] sm:$0xff]
    %v1643 = vld [vmem:[%s1 + $0xad8] sm:$0xff]
    %v1644 = vld [vmem:[%s1 + $0xb38] sm:$0xff]
    %v1645 = vld [vmem:[%s1 + $0xb98] sm:$0xff]
    %v1646 = vld [vmem:[%s1 + $0xbf8] sm:$0xff]
    %v1647 = vld [vmem:[%s1 + $0xc58] sm:$0xff]
    %v1648 = vld [vmem:[%s1 + $0xcb8] sm:$0xff]
    %v1649 = vld [vmem:[%s1 + $0xd18] sm:$0xff]
    %v1650 = vld [vmem:[%s1 + $0xd78] sm:$0xff]
    %v1651 = vld [vmem:[%s1 + $0xdd8] sm:$0xff]
    %v1652 = vld [vmem:[%s1 + $0xe38] sm:$0xf]
    %v1654 = vsel %vm90, %v1652, 0
    %1656 = vmatpush.msra.mxu0 %v1630
    %1657 = vmatpush.msra.mxu0 %v1629
    %1658 = vmatpush.msra.mxu0 %v1628
    %1659 = vmatpush.msra.mxu0 %v1627
    %1660 = vmatpush.msra.mxu0 %v1626
    %1661 = vmatpush.msra.mxu0 %v1625
    %1662 = vmatpush.msra.mxu0 %v1624
    %1663 = vmatpush.msra.mxu0 %v1623
    %1664 = vmatpush.msra.mxu0 %v1622
    %1665 = vmatpush.msra.mxu0 %v1621
    %1666 = vmatpush.msra.mxu0 %v1620
    %1667 = vmatpush.msra.mxu0 %v1619
    %1668 = vmatpush.msra.mxu0 %v1618
    %1669 = vmatpush.msra.mxu0 %v1617
    %1670 = vmatpush.msra.mxu0 %v1616
    %1671 = vmatpush.msra.mxu0 %v1615
    %1672 = vmatmul.f32.gmra.mxu0 %v27
    %v1673 = vpop.f32.mrf.mxu0
    %v1674 = vadd.f32 0.0, %v1673
    %1675 = vmatmul.f32.gmra.mxu0 %v30
    %v1676 = vpop.f32.mrf.mxu0
    %v1677 = vadd.f32 0.0, %v1676
    %1678 = vmatmul.f32.gmra.mxu0 %v33
    %v1679 = vpop.f32.mrf.mxu0
    %v1680 = vadd.f32 0.0, %v1679
    %1681 = vmatmul.f32.gmra.mxu0 %v36
    %v1682 = vpop.f32.mrf.mxu0
    %v1683 = vadd.f32 0.0, %v1682
    %1684 = vdwg.mxu0
    %1685 = vmatpush.msra.mxu0 %v1646
    %1686 = vmatpush.msra.mxu0 %v1645
    %1687 = vmatpush.msra.mxu0 %v1644
    %1688 = vmatpush.msra.mxu0 %v1643
    %1689 = vmatpush.msra.mxu0 %v1642
    %1690 = vmatpush.msra.mxu0 %v1641
    %1691 = vmatpush.msra.mxu0 %v1640
    %1692 = vmatpush.msra.mxu0 %v1639
    %1693 = vmatpush.msra.mxu0 %v1638
    %1694 = vmatpush.msra.mxu0 %v1637
    %1695 = vmatpush.msra.mxu0 %v1636
    %1696 = vmatpush.msra.mxu0 %v1635
    %1697 = vmatpush.msra.mxu0 %v1634
    %1698 = vmatpush.msra.mxu0 %v1633
    %1699 = vmatpush.msra.mxu0 %v1632
    %1700 = vmatpush.msra.mxu0 %v1631
    %1701 = vmatmul.f32.gmra.mxu0 %v28
    %v1702 = vpop.f32.mrf.mxu0
    %v1703 = vadd.f32 %v1674, %v1702
    %1704 = vmatmul.f32.gmra.mxu0 %v31
    %v1705 = vpop.f32.mrf.mxu0
    %v1706 = vadd.f32 %v1677, %v1705
    %1707 = vmatmul.f32.gmra.mxu0 %v34
    %v1708 = vpop.f32.mrf.mxu0
    %v1709 = vadd.f32 %v1680, %v1708
    %1710 = vmatmul.f32.gmra.mxu0 %v37
    %v1711 = vpop.f32.mrf.mxu0
    %v1712 = vadd.f32 %v1683, %v1711
    %1713 = vdwg.mxu0
    %1714 = vmatpush.msra.mxu0 0.0
    %1715 = vmatpush.msra.mxu0 0.0
    %1716 = vmatpush.msra.mxu0 0.0
    %1717 = vmatpush.msra.mxu0 0.0
    %1718 = vmatpush.msra.mxu0 0.0
    %1719 = vmatpush.msra.mxu0 0.0
    %1720 = vmatpush.msra.mxu0 0.0
    %1721 = vmatpush.msra.mxu0 0.0
    %1722 = vmatpush.msra.mxu0 0.0
    %1723 = vmatpush.msra.mxu0 0.0
    %1724 = vmatpush.msra.mxu0 %v1654
    %1725 = vmatpush.msra.mxu0 %v1651
    %1726 = vmatpush.msra.mxu0 %v1650
    %1727 = vmatpush.msra.mxu0 %v1649
    %1728 = vmatpush.msra.mxu0 %v1648
    %1729 = vmatpush.msra.mxu0 %v1647
    %1730 = vmatmul.f32.gmra.mxu0 %v79
    %v1731 = vpop.f32.mrf.mxu0
    %v1732 = vadd.f32 %v1703, %v1731
    %1733 = vmatmul.f32.gmra.mxu0 %v82
    %v1734 = vpop.f32.mrf.mxu0
    %v1735 = vadd.f32 %v1706, %v1734
    %1736 = vmatmul.f32.gmra.mxu0 %v85
    %v1737 = vpop.f32.mrf.mxu0
    %v1738 = vadd.f32 %v1709, %v1737
    %1739 = vmatmul.f32.gmra.mxu0 %v88
    %v1740 = vpop.f32.mrf.mxu0
    %v1741 = vadd.f32 %v1712, %v1740
    %1742 = vdwg.mxu0
    %1743 = vst [vmem:[#allocation2] sm:$0xff] %v1732
    %1744 = vst [vmem:[#allocation2 + $0x8] sm:$0xff] %v1735
    %1745 = vst [vmem:[#allocation2 + $0x10] sm:$0xff] %v1738
    %1746 = vst [vmem:[#allocation2 + $0x18] sm:$0xff] %v1741
    %v1747 = vld [vmem:[#allocation2 + $0x4] sm:$0xff]
    %v1748 = vld [vmem:[#allocation2 + $0xc] sm:$0xf]
    %v1749 = vld [vmem:[#allocation2 + $0x14] sm:$0xff]
    %v1750 = vld [vmem:[#allocation2 + $0x1c] sm:$0xf]
    %v1751 = vadd.f32 %v1611, %v1747
    %v1752 = vadd.f32 %v1612, %v1748
    %v1753 = vadd.f32 %v1613, %v1749
    %v1754 = vadd.f32 %v1614, %v1750
    %v1755 = vsel %vm90, %v1752, -inf
    %v1756 = vmax.f32 %v1751, %v1755
    %v1757 = vrot.slane %v1756, 4
    %v1758 = vmax.f32 %v1756, %v1757
    %v1759 = vrot.slane %v1758, 2
    %v1760 = vmax.f32 %v1758, %v1759
    %v1761 = vrot.slane %v1760, 1
    %v1762 = vmax.f32 %v1760, %v1761
    %v1763 = vsel %vm90, %v1754, -inf
    %v1764 = vmax.f32 %v1753, %v1763
    %v1765 = vrot.slane %v1764, 4
    %v1766 = vmax.f32 %v1764, %v1765
    %v1767 = vrot.slane %v1766, 2
    %v1768 = vmax.f32 %v1766, %v1767
    %v1769 = vrot.slane %v1768, 1
    %v1770 = vmax.f32 %v1768, %v1769
    %vm1773 = vcmask 1041409
    %v1774 = vsel %vm1773, %v485, %v477
    %v1778 = vsel %vm1773, %v1058, %v1050
    %v1782 = vsel %vm1773, %v1770, %v1762
    %v1784 = vld [vmem:[%s2] sm:$0x7]
    %v1786 = vperm.slane %v1784, 0
    %v1787 = vperm.slane %v1784, 1
    %v1788 = vperm.slane %v1784, 2
    %v1792 = vadd.f32 %v1774, %v1786
    %v1793 = vadd.f32 %v1778, %v1787
    %v1794 = vadd.f32 %v1782, %v1788
    %v1795 = vmax.f32 %v1792, 0.0
    %v1796 = vmax.f32 %v1793, 0.0
    %v1797 = vmax.f32 %v1794, 0.0
    %v1798 = vld [vmem:[%s3] sm:$0xff]
    %v1799 = vld [vmem:[%s3 + $0x8] sm:$0xff]
    %v1800 = vld [vmem:[%s3 + $0x10] sm:$0xff]
    %v1801 = vld [vmem:[%s3 + $0x18] sm:$0xff]
    %v1802 = vld [vmem:[%s3 + $0x20] sm:$0xff]
    %v1803 = vld [vmem:[%s3 + $0x28] sm:$0xff]
    %v1804 = vld [vmem:[%s3 + $0x30] sm:$0xff]
    %v1805 = vld [vmem:[%s3 + $0x38] sm:$0xff]
    %v1806 = vld [vmem:[%s3 + $0x40] sm:$0xff]
    %v1807 = vld [vmem:[%s3 + $0x48] sm:$0xff]
    %v1808 = vld [vmem:[%s3 + $0x50] sm:$0xff]
    %v1809 = vld [vmem:[%s3 + $0x58] sm:$0xff]
    %v1810 = vld [vmem:[%s3 + $0x60] sm:$0xff]
    %v1811 = vld [vmem:[%s3 + $0x68] sm:$0xff]
    %v1812 = vld [vmem:[%s3 + $0x70] sm:$0xff]
    %v1813 = vld [vmem:[%s3 + $0x78] sm:$0xff]
    %v1814 = vld [vmem:[%s3 + $0x80] sm:$0xff]
    %v1815 = vld [vmem:[%s3 + $0x88] sm:$0xff]
    %v1816 = vld [vmem:[%s3 + $0x90] sm:$0xff]
    %v1817 = vld [vmem:[%s3 + $0x98] sm:$0xff]
    %v1818 = vld [vmem:[%s3 + $0xa0] sm:$0xff]
    %v1819 = vld [vmem:[%s3 + $0xa8] sm:$0xff]
    %v1820 = vld [vmem:[%s3 + $0xb0] sm:$0xff]
    %v1821 = vld [vmem:[%s3 + $0xb8] sm:$0xff]
    %v1822 = vld [vmem:[%s3 + $0xc0] sm:$0xff]
    %v1823 = vld [vmem:[%s3 + $0xc8] sm:$0xff]
    %v1824 = vld [vmem:[%s3 + $0xd0] sm:$0xff]
    %v1825 = vld [vmem:[%s3 + $0xd8] sm:$0xff]
    %v1826 = vld [vmem:[%s3 + $0xe0] sm:$0xff]
    %v1827 = vld [vmem:[%s3 + $0xe8] sm:$0xff]
    %v1828 = vld [vmem:[%s3 + $0xf0] sm:$0xff]
    %v1829 = vld [vmem:[%s3 + $0xf8] sm:$0xff]
    %v1830 = vld [vmem:[%s3 + $0x100] sm:$0xff]
    %v1831 = vld [vmem:[%s3 + $0x108] sm:$0xff]
    %v1832 = vld [vmem:[%s3 + $0x110] sm:$0xff]
    %v1833 = vld [vmem:[%s3 + $0x118] sm:$0xff]
    %v1834 = vld [vmem:[%s3 + $0x120] sm:$0xff]
    %v1835 = vld [vmem:[%s3 + $0x128] sm:$0xff]
    %v1836 = vld [vmem:[%s3 + $0x130] sm:$0xff]
    %v1837 = vld [vmem:[%s3 + $0x138] sm:$0xff]
    %v1838 = vld [vmem:[%s3 + $0x140] sm:$0xff]
    %v1839 = vld [vmem:[%s3 + $0x148] sm:$0xff]
    %v1840 = vld [vmem:[%s3 + $0x150] sm:$0xff]
    %v1841 = vld [vmem:[%s3 + $0x158] sm:$0xff]
    %v1842 = vld [vmem:[%s3 + $0x160] sm:$0xff]
    %v1843 = vld [vmem:[%s3 + $0x168] sm:$0xff]
    %v1844 = vld [vmem:[%s3 + $0x170] sm:$0xff]
    %v1845 = vld [vmem:[%s3 + $0x178] sm:$0xff]
    %v1846 = vld [vmem:[%s4] sm:$0x1]
    %v1848 = vperm.slane %v1846, 0
    %1850 = vmatpush.msra.mxu0 %v1813
    %1851 = vmatpush.msra.mxu0 %v1812
    %1852 = vmatpush.msra.mxu0 %v1811
    %1853 = vmatpush.msra.mxu0 %v1810
    %1854 = vmatpush.msra.mxu0 %v1809
    %1855 = vmatpush.msra.mxu0 %v1808
    %1856 = vmatpush.msra.mxu0 %v1807
    %1857 = vmatpush.msra.mxu0 %v1806
    %1858 = vmatpush.msra.mxu0 %v1805
    %1859 = vmatpush.msra.mxu0 %v1804
    %1860 = vmatpush.msra.mxu0 %v1803
    %1861 = vmatpush.msra.mxu0 %v1802
    %1862 = vmatpush.msra.mxu0 %v1801
    %1863 = vmatpush.msra.mxu0 %v1800
    %1864 = vmatpush.msra.mxu0 %v1799
    %1865 = vmatpush.msra.mxu0 %v1798
    %1866 = vmatmul.f32.gmra.mxu0 %v1795
    %v1867 = vpop.f32.mrf.mxu0
    %v1868 = vadd.f32 %v1848, %v1867
    %1869 = vdwg.mxu0
    %1870 = vmatpush.msra.mxu0 %v1829
    %1871 = vmatpush.msra.mxu0 %v1828
    %1872 = vmatpush.msra.mxu0 %v1827
    %1873 = vmatpush.msra.mxu0 %v1826
    %1874 = vmatpush.msra.mxu0 %v1825
    %1875 = vmatpush.msra.mxu0 %v1824
    %1876 = vmatpush.msra.mxu0 %v1823
    %1877 = vmatpush.msra.mxu0 %v1822
    %1878 = vmatpush.msra.mxu0 %v1821
    %1879 = vmatpush.msra.mxu0 %v1820
    %1880 = vmatpush.msra.mxu0 %v1819
    %1881 = vmatpush.msra.mxu0 %v1818
    %1882 = vmatpush.msra.mxu0 %v1817
    %1883 = vmatpush.msra.mxu0 %v1816
    %1884 = vmatpush.msra.mxu0 %v1815
    %1885 = vmatpush.msra.mxu0 %v1814
    %1886 = vmatmul.f32.gmra.mxu0 %v1796
    %v1887 = vpop.f32.mrf.mxu0
    %v1888 = vadd.f32 %v1868, %v1887
    %1889 = vdwg.mxu0
    %1890 = vmatpush.msra.mxu0 %v1845
    %1891 = vmatpush.msra.mxu0 %v1844
    %1892 = vmatpush.msra.mxu0 %v1843
    %1893 = vmatpush.msra.mxu0 %v1842
    %1894 = vmatpush.msra.mxu0 %v1841
    %1895 = vmatpush.msra.mxu0 %v1840
    %1896 = vmatpush.msra.mxu0 %v1839
    %1897 = vmatpush.msra.mxu0 %v1838
    %1898 = vmatpush.msra.mxu0 %v1837
    %1899 = vmatpush.msra.mxu0 %v1836
    %1900 = vmatpush.msra.mxu0 %v1835
    %1901 = vmatpush.msra.mxu0 %v1834
    %1902 = vmatpush.msra.mxu0 %v1833
    %1903 = vmatpush.msra.mxu0 %v1832
    %1904 = vmatpush.msra.mxu0 %v1831
    %1905 = vmatpush.msra.mxu0 %v1830
    %1906 = vmatmul.f32.gmra.mxu0 %v1797
    %v1907 = vpop.f32.mrf.mxu0
    %v1908 = vadd.f32 %v1888, %v1907
    %1909 = vdwg.mxu0
    %v1910 = vld [vmem:[%s5] sm:$0xff]
    %v1911 = vld [vmem:[%s5 + $0x8] sm:$0xff]
    %v1912 = vld [vmem:[%s5 + $0x10] sm:$0xff]
    %v1913 = vld [vmem:[%s5 + $0x18] sm:$0xff]
    %v1914 = vld [vmem:[%s5 + $0x20] sm:$0xff]
    %v1915 = vld [vmem:[%s5 + $0x28] sm:$0xff]
    %v1916 = vld [vmem:[%s5 + $0x30] sm:$0xff]
    %v1917 = vld [vmem:[%s5 + $0x38] sm:$0xff]
    %v1918 = vld [vmem:[%s5 + $0x40] sm:$0xff]
    %v1919 = vld [vmem:[%s5 + $0x48] sm:$0xff]
    %v1920 = vld [vmem:[%s5 + $0x50] sm:$0xff]
    %v1921 = vld [vmem:[%s5 + $0x58] sm:$0xff]
    %v1922 = vld [vmem:[%s5 + $0x60] sm:$0xff]
    %v1923 = vld [vmem:[%s5 + $0x68] sm:$0xff]
    %v1924 = vld [vmem:[%s5 + $0x70] sm:$0xff]
    %v1925 = vld [vmem:[%s5 + $0x78] sm:$0xff]
    %v1926 = vld [vmem:[%s6] sm:$0x1]
    %v1928 = vperm.slane %v1926, 0
    %1930 = vmatpush.msra.mxu0 %v1925
    %1931 = vmatpush.msra.mxu0 %v1924
    %1932 = vmatpush.msra.mxu0 %v1923
    %1933 = vmatpush.msra.mxu0 %v1922
    %1934 = vmatpush.msra.mxu0 %v1921
    %1935 = vmatpush.msra.mxu0 %v1920
    %1936 = vmatpush.msra.mxu0 %v1919
    %1937 = vmatpush.msra.mxu0 %v1918
    %1938 = vmatpush.msra.mxu0 %v1917
    %1939 = vmatpush.msra.mxu0 %v1916
    %1940 = vmatpush.msra.mxu0 %v1915
    %1941 = vmatpush.msra.mxu0 %v1914
    %1942 = vmatpush.msra.mxu0 %v1913
    %1943 = vmatpush.msra.mxu0 %v1912
    %1944 = vmatpush.msra.mxu0 %v1911
    %1945 = vmatpush.msra.mxu0 %v1910
    %1946 = vmatmul.f32.gmra.mxu0 %v1908
    %v1947 = vpop.f32.mrf.mxu0
    %v1948 = vadd.f32 %v1928, %v1947
    %1949 = vdwg.mxu0
    %vm1950 = vcmask 9216
    %1951 = vst.msk [vmem:[#allocation3] sm:$0x3] %vm1950, %v1948
    // Predicated region
    $region30: #{net_forward.1} parent=1 // pred_check
      _
    $region31: #{net_forward.1} parent=1 // pred_check_branch
      %1953 = sbr.rel (0) target = $region33
    $region32: #{net_forward.1} parent=1 // pred_region
      %1955 = vsyncadd [#allocation4], 0
      %s1957 = sshll.u32 [#allocation3], 4
      %s1958 = int_to_ptr.vmem [resolvable:$true] %s1957
      %s1959 = sshll.u32 %s7, 4
      %s1960 = int_to_ptr.hbm [resolvable:$true] %s1959
      %1962 = dma.vmem_to_hbm [thread:$0]  %s1958, 32, %s1960, [#allocation4]
    $region33: #{net_forward.1} parent=1 // pred_fallthru
      _
    // Predicated region
    $region34: #{net_forward.1} parent=1 // pred_check
      _
    $region35: #{net_forward.1} parent=1 // pred_check_branch
      %1964 = sbr.rel (0) target = $region37
    $region36: #{net_forward.1} parent=1 // pred_region
      %1966 = dma.done [#allocation4], 32
    $region37: #{net_forward.1} parent=1 // pred_fallthru
      _
    %1967 = vsyncpa [#allocation4], 1

</llo_original>
